<compile_context>
chip_gen: v5e
topology: v5e:2x2
jax: 0.10.0
libtpu: 0.0.40
codegen_flags: <defaults>
</compile_context>

<pallas_src>
import functools

import jax
import jax.numpy as jnp
from jax.experimental import pallas as pl

# ---- module hyper-parameters (small, consistent with the PyTorch module) ----
BATCH        = 2
NUM_QUERIES  = 8
HIDDEN       = 32          # hidden_dim
MASK_DIM     = 32          # mask_dim
NUM_HEADS    = 8
NUM_LEVELS   = 4
NUM_LAYERS   = 3

MASK_THRESHOLD = 0.5
DO_BOLTZMANN   = True
SAMPLE_RATIO   = 0.1
BASE_TEMP      = 1.0
LN_EPS         = 1e-4      # nn.LayerNorm(hidden_dim, eps=0.0001)


# =============================== Pallas kernel ================================

def _fused_decoder_kernel(tgt_ref, head_w_ref, head_b_ref,
                          layer_w_ref, layer_b_ref, rand_ref,       # inputs
                          out_ref, mask_ref, *opt_inter,            # outputs
                          num_heads, threshold, base_temp, sample_ratio,
                          ln_eps, do_boltzmann, collect_intermediate):
    """Whole decoder (all batch items, all layers, all Boltzmann masks) in one step."""
    inter_ref = opt_inter[0] if collect_intermediate else None
    B, Q, _ = tgt_ref.shape
    L = layer_w_ref.shape[0]
    M = head_w_ref.shape[2]
    H = num_heads
    n_samples = int(Q * sample_ratio)          # == 0 at these shapes (as in torch)
    inv_sqrt_m = 1.0 / (M ** 0.5)

    # Packed head parameters.
    ln_w, ln_b = head_b_ref[0:1, :], head_b_ref[1:2, :]
    b1, b2, b3 = head_b_ref[2:3, :], head_b_ref[3:4, :], head_b_ref[4:5, :]
    w1, w2, w3 = head_w_ref[0], head_w_ref[1], head_w_ref[2]

    def write_mask_slab(xs, layer_id, call_idx):
        """Writes one lane-dense (Q, B*H*Q) attention-mask slab (full 128-lane stores)."""
        base_cols, mp_cols, hard_cols = [], [], []
        for x in xs:                                          # unrolled over batch
            # decoder_norm: LayerNorm(hidden_dim, eps) with population variance.
            mean = jnp.mean(x, axis=-1, keepdims=True)
            var = jnp.mean((x - mean) ** 2, axis=-1, keepdims=True)
            xn = (x - mean) * jax.lax.rsqrt(var + ln_eps) * ln_w + ln_b
            # mask_embed = MLP(hidden, hidden, mask_dim, num_layers=3)
            h = jnp.maximum(jnp.dot(xn, w1, preferred_element_type=jnp.float32) + b1, 0.0)
            h = jnp.maximum(jnp.dot(h, w2, preferred_element_type=jnp.float32) + b2, 0.0)
            e = jnp.dot(h, w3, preferred_element_type=jnp.float32) + b3          # (Q, M)
            # attn = sigmoid(E E^T / sqrt(M)); 'nt' contraction, no explicit transpose.
            logits = jax.lax.dot_general(e, e, (((1,), (1,)), ((), ())),
                                         preferred_element_type=jnp.float32)
            attn = jax.nn.sigmoid(logits * inv_sqrt_m)                           # (Q, Q)

            if not do_boltzmann:
                hard_cols.append(jnp.tile((attn < threshold).astype(jnp.float32), (1, H)))
                continue

            base_cols.append(
                jnp.tile(1.0 - jax.nn.sigmoid((attn - threshold) * 100.0), (1, H)))
            if n_samples > 0:            # dead at Q=8 (n_samples==0) -> elided at trace
                temp = base_temp / (2.0 + layer_id)
                prob = jnp.exp(attn / temp) * (attn < threshold).astype(jnp.float32)
                prob = prob / (jnp.sum(prob, axis=-1, keepdims=True) + 1e-6)
                mp_cols.append(jnp.tile((1.0 - prob) ** n_samples, (1, H)))

        rows = slice(call_idx * Q, (call_idx + 1) * Q)
        if not do_boltzmann:
            # TODO(synk): reference returns a bool attn_mask here; stored as {0,1} f32.
            mask_ref[rows, :] = jnp.concatenate(hard_cols, axis=-1)
            return

        base_slab = jnp.concatenate(base_cols, axis=-1)        # (Q, B*H*Q) lane-dense
        rand_slab = rand_ref[rows, :]                           # (Q, B*H*Q)
        if n_samples > 0:
            mp_slab = jnp.concatenate(mp_cols, axis=-1)
        else:
            mp_slab = 1.0                 # (1 - p)**0 == 1, exactly as the reference
        boltz = 1.0 - jax.nn.sigmoid((rand_slab - mp_slab) * 100.0)
        mask_ref[rows, :] = base_slab * boltz                   # one full 128-lane store

    xs = [tgt_ref[b].astype(jnp.float32) for b in range(B)]     # (Q, D) per batch item
    write_mask_slab(xs, layer_id=-1.0, call_idx=0)

    for lid in range(L):
        # TODO(synk): stand-in for the external deformable decoder layer; the real
        # layer also consumes (query_pos, reference_points_input, src, spatial
        # shapes, attn_mask, padding mask).  Residual MLP keeps the
        # (output, tgt_mask) contract with tgt_mask == output.
        w, bias = layer_w_ref[lid], layer_b_ref[lid]
        xs = [x + jnp.maximum(jnp.dot(x, w, preferred_element_type=jnp.float32) + bias,
                              0.0)
              for x in xs]
        if collect_intermediate:
            for b in range(B):
                inter_ref[lid, b, :, :] = xs[b]
        write_mask_slab(xs, layer_id=float(lid), call_idx=lid + 1)

    for b in range(B):
        out_ref[b, :, :] = xs[b].astype(out_ref.dtype)


# ================================ wrappers ====================================

def _fused_decoder_call(params, tgt, rand_slab, *, collect_intermediate=False):
    """One pallas_call for the whole decoder: no grid, whole problem resident in VMEM."""
    B, Q, D = tgt.shape
    L = params["layer_w"].shape[0]
    H = NUM_HEADS

    kernel = functools.partial(
        _fused_decoder_kernel,
        num_heads=H, threshold=float(MASK_THRESHOLD),
        base_temp=float(BASE_TEMP), sample_ratio=float(SAMPLE_RATIO),
        ln_eps=float(LN_EPS), do_boltzmann=DO_BOLTZMANN,
        collect_intermediate=collect_intermediate)

    out_shape = [
        jax.ShapeDtypeStruct((B, Q, D), jnp.float32),               # final output
        jax.ShapeDtypeStruct(((L + 1) * Q, B * H * Q), jnp.float32),  # packed masks (32,128)
    ]
    if collect_intermediate:
        out_shape.append(jax.ShapeDtypeStruct((L, B, Q, D), jnp.float32))

    return pl.pallas_call(kernel, out_shape=tuple(out_shape))(
        tgt, params["head_w"], params["head_b"],
        params["layer_w"], params["layer_b"], rand_slab)


def unpack_attn_masks(masks_packed, batch=BATCH, num_layers=NUM_LAYERS,
                      num_heads=NUM_HEADS):
    """((L+1)*Q, B*H*Q) -> (L+1, B*H, Q, Q): the PyTorch attn-mask layout per call."""
    L1 = num_layers + 1
    L1Q, BHQ = masks_packed.shape
    Q = L1Q // L1
    B, H = batch, num_heads
    m = masks_packed.reshape(L1, Q, B, H, Q)
    return m.transpose(0, 2, 3, 1, 4).reshape(L1, B * H, Q, Q)


def boltzformer_decoder_forward(params, tgt, reference_points, src,
                                src_spatial_shapes, src_level_start_index,
                                src_valid_ratios, tgt_mask, rng_key,
                                query_pos=None, src_padding_mask=None,
                                return_intermediate=False):
    B, Q, D = tgt.shape
    L = NUM_LAYERS
    H = NUM_HEADS

    # reference_points_input (API parity; only the real deformable layer uses it).
    if reference_points.shape[-1] == 4:
        rp_input = reference_points[:, :, None] * jnp.concatenate(
            [src_valid_ratios, src_valid_ratios], -1)[:, None]
    else:
        assert reference_points.shape[-1] == 2
        rp_input = reference_points[:, :, None] * src_valid_ratios[:, None]
    del rp_input  # TODO(synk): feed into the real deformable decoder layer.

    # torch.rand_like replacement: one uniform per (call, batch, head, q, k),
    # laid out lane-dense to match the packed mask slab written by the kernel.
    rand_slab = jax.random.uniform(rng_key, ((L + 1) * Q, B * H * Q), jnp.float32)

    results = _fused_decoder_call(params, tgt, rand_slab,
                                  collect_intermediate=return_intermediate)
    output, masks_packed = results[0], results[1]
    # masks_packed holds all L+1 Boltzmann attention masks; unpack_attn_masks gives
    # the (B*H, Q, Q)-per-call PyTorch layout.  The stand-in layer ignores them.

    if return_intermediate:
        inter = results[2]                                        # (L, B, Q, D)
        inter_rp = jnp.broadcast_to(reference_points[None],
                                    (L,) + reference_points.shape)
        return inter, inter_rp
    return output, reference_points


# ============================ deterministic params ============================

def init_params(key):
    assert MASK_DIM == HIDDEN, "packed-parameter layout assumes mask_dim == hidden_dim"

    def linear(k, fan_in, fan_out):
        kw, kb = jax.random.split(k)
        lim = 1.0 / (fan_in ** 0.5)
        w = jax.random.uniform(kw, (fan_in, fan_out), jnp.float32, -lim, lim)
        b = jax.random.uniform(kb, (fan_out,), jnp.float32, -lim, lim)
        return w, b

    keys = jax.random.split(key, 3 + NUM_LAYERS)
    w1, b1 = linear(keys[0], HIDDEN, HIDDEN)
    w2, b2 = linear(keys[1], HIDDEN, HIDDEN)
    w3, b3 = linear(keys[2], HIDDEN, MASK_DIM)

    head_w = jnp.stack([w1, w2, w3], axis=0)                     # (3, D, D)
    ln_w = jnp.ones((HIDDEN,), jnp.float32)
    ln_b = jnp.zeros((HIDDEN,), jnp.float32)
    zero = jnp.zeros((HIDDEN,), jnp.float32)
    head_b = jnp.stack([ln_w, ln_b, b1, b2, b3, zero, zero, zero], axis=0)  # (8, D)

    lw, lb = [], []
    for i in range(NUM_LAYERS):
        w, b = linear(keys[3 + i], HIDDEN, HIDDEN)
        lw.append(w)
        lb.append(b[None, :])
    layer_w = jnp.stack(lw, axis=0)                               # (L, D, D)
    layer_b = jnp.stack(lb, axis=0)                               # (L, 1, D)

    return dict(head_w=head_w, head_b=head_b, layer_w=layer_w, layer_b=layer_b)


# ==================================== main ====================================

if __name__ == "__main__":
    key = jax.random.PRNGKey(0)
    k_param, k_tgt, k_ref, k_src, k_run = jax.random.split(key, 5)

    params = init_params(k_param)

    tgt = jax.random.normal(k_tgt, (BATCH, NUM_QUERIES, HIDDEN), jnp.float32)
    reference_points = jax.random.uniform(k_ref, (BATCH, NUM_QUERIES, 2), jnp.float32)

    src_spatial_shapes = jnp.array([[8, 8], [4, 4], [2, 2], [1, 1]], jnp.int32)
    src_level_start_index = jnp.array([0, 64, 80, 84], jnp.int32)
    total_src = 64 + 16 + 4 + 1
    src = jax.random.normal(k_src, (BATCH, total_src, HIDDEN), jnp.float32)
    src_valid_ratios = jnp.ones((BATCH, NUM_LEVELS, 2), jnp.float32)
    tgt_mask_in = jnp.zeros((BATCH, NUM_QUERIES, HIDDEN), jnp.float32)

    output, ref_pts = boltzformer_decoder_forward(
        params, tgt, reference_points, src, src_spatial_shapes,
        src_level_start_index, src_valid_ratios, tgt_mask_in, k_run)

    jax.block_until_ready((output, ref_pts))
    assert output.shape == (BATCH, NUM_QUERIES, HIDDEN)
    assert ref_pts.shape == (BATCH, NUM_QUERIES, 2)
    assert bool(jnp.all(jnp.isfinite(output)))
    print("KERNEL_OK")
</pallas_src>

<mosaic_0001>
module attributes {stable_mosaic.version = 11 : i64} {
  func.func @_fused_decoder_kernel(%arg0: memref<2x8x32xf32, #tpu.memory_space<vmem>>, %arg1: memref<3x32x32xf32, #tpu.memory_space<vmem>>, %arg2: memref<8x32xf32, #tpu.memory_space<vmem>>, %arg3: memref<3x32x32xf32, #tpu.memory_space<vmem>>, %arg4: memref<3x1x32xf32, #tpu.memory_space<vmem>>, %arg5: memref<32x128xf32, #tpu.memory_space<vmem>>, %arg6: memref<2x8x32xf32, #tpu.memory_space<vmem>>, %arg7: memref<32x128xf32, #tpu.memory_space<vmem>>) attributes {dimension_semantics = [], scalar_prefetch = 0 : i64, scratch_operands = 0 : i64, tpu.core_type = #tpu.core_type<tc>} {
    %c0 = arith.constant 0 : index
    %c0_0 = arith.constant 0 : index
    %0 = vector.load %arg2[%c0, %c0_0] : memref<8x32xf32, #tpu.memory_space<vmem>>, vector<1x32xf32>
    %c1 = arith.constant 1 : index
    %c0_1 = arith.constant 0 : index
    %1 = vector.load %arg2[%c1, %c0_1] : memref<8x32xf32, #tpu.memory_space<vmem>>, vector<1x32xf32>
    %c2 = arith.constant 2 : index
    %c0_2 = arith.constant 0 : index
    %2 = vector.load %arg2[%c2, %c0_2] : memref<8x32xf32, #tpu.memory_space<vmem>>, vector<1x32xf32>
    %c3 = arith.constant 3 : index
    %c0_3 = arith.constant 0 : index
    %3 = vector.load %arg2[%c3, %c0_3] : memref<8x32xf32, #tpu.memory_space<vmem>>, vector<1x32xf32>
    %c4 = arith.constant 4 : index
    %c0_4 = arith.constant 0 : index
    %4 = vector.load %arg2[%c4, %c0_4] : memref<8x32xf32, #tpu.memory_space<vmem>>, vector<1x32xf32>
    %c0_5 = arith.constant 0 : index
    %c0_6 = arith.constant 0 : index
    %c0_7 = arith.constant 0 : index
    %5 = vector.load %arg1[%c0_5, %c0_6, %c0_7] : memref<3x32x32xf32, #tpu.memory_space<vmem>>, vector<1x32x32xf32>
    %6 = vector.shape_cast %5 : vector<1x32x32xf32> to vector<32x32xf32>
    %c1_8 = arith.constant 1 : index
    %c0_9 = arith.constant 0 : index
    %c0_10 = arith.constant 0 : index
    %7 = vector.load %arg1[%c1_8, %c0_9, %c0_10] : memref<3x32x32xf32, #tpu.memory_space<vmem>>, vector<1x32x32xf32>
    %8 = vector.shape_cast %7 : vector<1x32x32xf32> to vector<32x32xf32>
    %c2_11 = arith.constant 2 : index
    %c0_12 = arith.constant 0 : index
    %c0_13 = arith.constant 0 : index
    %9 = vector.load %arg1[%c2_11, %c0_12, %c0_13] : memref<3x32x32xf32, #tpu.memory_space<vmem>>, vector<1x32x32xf32>
    %10 = vector.shape_cast %9 : vector<1x32x32xf32> to vector<32x32xf32>
    %c0_14 = arith.constant 0 : index
    %c0_15 = arith.constant 0 : index
    %c0_16 = arith.constant 0 : index
    %11 = vector.load %arg0[%c0_14, %c0_15, %c0_16] : memref<2x8x32xf32, #tpu.memory_space<vmem>>, vector<1x8x32xf32>
    %12 = vector.shape_cast %11 : vector<1x8x32xf32> to vector<8x32xf32>
    %c1_17 = arith.constant 1 : index
    %c0_18 = arith.constant 0 : index
    %c0_19 = arith.constant 0 : index
    %13 = vector.load %arg0[%c1_17, %c0_18, %c0_19] : memref<2x8x32xf32, #tpu.memory_space<vmem>>, vector<1x8x32xf32>
    %14 = vector.shape_cast %13 : vector<1x8x32xf32> to vector<8x32xf32>
    %cst = arith.constant dense<0.000000e+00> : vector<8xf32>
    %15 = vector.multi_reduction <add>, %12, %cst [1] : vector<8x32xf32> to vector<8xf32>
    %16 = vector.shape_cast %15 : vector<8xf32> to vector<8x1xf32>
    %cst_20 = arith.constant 3.200000e+01 : f32
    %17 = vector.broadcast %cst_20 : f32 to vector<8x1xf32>
    %18 = arith.divf %16, %17 : vector<8x1xf32>
    %19 = vector.broadcast %18 : vector<8x1xf32> to vector<8x32xf32>
    %20 = arith.subf %12, %19 : vector<8x32xf32>
    %21 = arith.mulf %20, %20 : vector<8x32xf32>
    %cst_21 = arith.constant dense<0.000000e+00> : vector<8xf32>
    %22 = vector.multi_reduction <add>, %21, %cst_21 [1] : vector<8x32xf32> to vector<8xf32>
    %23 = vector.shape_cast %22 : vector<8xf32> to vector<8x1xf32>
    %cst_22 = arith.constant 3.200000e+01 : f32
    %24 = vector.broadcast %cst_22 : f32 to vector<8x1xf32>
    %25 = arith.divf %23, %24 : vector<8x1xf32>
    %26 = vector.broadcast %18 : vector<8x1xf32> to vector<8x32xf32>
    %27 = arith.subf %12, %26 : vector<8x32xf32>
    %cst_23 = arith.constant 9.99999974E-5 : f32
    %28 = vector.broadcast %cst_23 : f32 to vector<8x1xf32>
    %29 = arith.addf %25, %28 : vector<8x1xf32>
    %30 = math.rsqrt %29 : vector<8x1xf32>
    %31 = vector.broadcast %30 : vector<8x1xf32> to vector<8x32xf32>
    %32 = arith.mulf %27, %31 : vector<8x32xf32>
    %33 = vector.broadcast %0 : vector<1x32xf32> to vector<8x32xf32>
    %34 = arith.mulf %32, %33 : vector<8x32xf32>
    %35 = vector.broadcast %1 : vector<1x32xf32> to vector<8x32xf32>
    %36 = arith.addf %34, %35 : vector<8x32xf32>
    %cst_24 = arith.constant dense<0.000000e+00> : vector<8x32xf32>
    %37 = tpu.matmul %36, %6, %cst_24 {dimension_numbers = #tpu.dot_dimension_numbers<[1], [0], [0], [1], [0, 0, 1, 1], [], []>} : vector<8x32xf32>, vector<32x32xf32>, vector<8x32xf32> -> vector<8x32xf32>
    %38 = vector.broadcast %2 : vector<1x32xf32> to vector<8x32xf32>
    %39 = arith.addf %37, %38 : vector<8x32xf32>
    %cst_25 = arith.constant 0.000000e+00 : f32
    %40 = vector.broadcast %cst_25 : f32 to vector<8x32xf32>
    %41 = arith.maximumf %39, %40 : vector<8x32xf32>
    %cst_26 = arith.constant dense<0.000000e+00> : vector<8x32xf32>
    %42 = tpu.matmul %41, %8, %cst_26 {dimension_numbers = #tpu.dot_dimension_numbers<[1], [0], [0], [1], [0, 0, 1, 1], [], []>} : vector<8x32xf32>, vector<32x32xf32>, vector<8x32xf32> -> vector<8x32xf32>
    %43 = vector.broadcast %3 : vector<1x32xf32> to vector<8x32xf32>
    %44 = arith.addf %42, %43 : vector<8x32xf32>
    %cst_27 = arith.constant 0.000000e+00 : f32
    %45 = vector.broadcast %cst_27 : f32 to vector<8x32xf32>
    %46 = arith.maximumf %44, %45 : vector<8x32xf32>
    %cst_28 = arith.constant dense<0.000000e+00> : vector<8x32xf32>
    %47 = tpu.matmul %46, %10, %cst_28 {dimension_numbers = #tpu.dot_dimension_numbers<[1], [0], [0], [1], [0, 0, 1, 1], [], []>} : vector<8x32xf32>, vector<32x32xf32>, vector<8x32xf32> -> vector<8x32xf32>
    %48 = vector.broadcast %4 : vector<1x32xf32> to vector<8x32xf32>
    %49 = arith.addf %47, %48 : vector<8x32xf32>
    %cst_29 = arith.constant dense<0.000000e+00> : vector<8x8xf32>
    %50 = tpu.matmul %49, %49, %cst_29 {dimension_numbers = #tpu.dot_dimension_numbers<[1], [1], [0], [0], [0, 0, 1, 0], [], []>} : vector<8x32xf32>, vector<8x32xf32>, vector<8x8xf32> -> vector<8x8xf32>
    %cst_30 = arith.constant 0.176776692 : f32
    %51 = vector.broadcast %cst_30 : f32 to vector<8x8xf32>
    %52 = arith.mulf %50, %51 : vector<8x8xf32>
    %53 = arith.negf %52 : vector<8x8xf32>
    %54 = math.exp %53 : vector<8x8xf32>
    %cst_31 = arith.constant 1.000000e+00 : f32
    %55 = vector.broadcast %cst_31 : f32 to vector<8x8xf32>
    %56 = arith.addf %55, %54 : vector<8x8xf32>
    %57 = arith.divf %55, %56 : vector<8x8xf32>
    %cst_32 = arith.constant 5.000000e-01 : f32
    %58 = vector.broadcast %cst_32 : f32 to vector<8x8xf32>
    %59 = arith.subf %57, %58 : vector<8x8xf32>
    %cst_33 = arith.constant 1.000000e+02 : f32
    %60 = vector.broadcast %cst_33 : f32 to vector<8x8xf32>
    %61 = arith.mulf %59, %60 : vector<8x8xf32>
    %62 = arith.negf %61 : vector<8x8xf32>
    %63 = math.exp %62 : vector<8x8xf32>
    %cst_34 = arith.constant 1.000000e+00 : f32
    %64 = vector.broadcast %cst_34 : f32 to vector<8x8xf32>
    %65 = arith.addf %64, %63 : vector<8x8xf32>
    %66 = arith.divf %64, %65 : vector<8x8xf32>
    %cst_35 = arith.constant 1.000000e+00 : f32
    %67 = vector.broadcast %cst_35 : f32 to vector<8x8xf32>
    %68 = arith.subf %67, %66 : vector<8x8xf32>
    %69 = tpu.concatenate %68, %68, %68, %68, %68, %68, %68, %68 in 1 : vector<8x8xf32>, vector<8x8xf32>, vector<8x8xf32>, vector<8x8xf32>, vector<8x8xf32>, vector<8x8xf32>, vector<8x8xf32>, vector<8x8xf32> -> vector<8x64xf32>
    %cst_36 = arith.constant dense<0.000000e+00> : vector<8xf32>
    %70 = vector.multi_reduction <add>, %14, %cst_36 [1] : vector<8x32xf32> to vector<8xf32>
    %71 = vector.shape_cast %70 : vector<8xf32> to vector<8x1xf32>
    %cst_37 = arith.constant 3.200000e+01 : f32
    %72 = vector.broadcast %cst_37 : f32 to vector<8x1xf32>
    %73 = arith.divf %71, %72 : vector<8x1xf32>
    %74 = vector.broadcast %73 : vector<8x1xf32> to vector<8x32xf32>
    %75 = arith.subf %14, %74 : vector<8x32xf32>
    %76 = arith.mulf %75, %75 : vector<8x32xf32>
    %cst_38 = arith.constant dense<0.000000e+00> : vector<8xf32>
    %77 = vector.multi_reduction <add>, %76, %cst_38 [1] : vector<8x32xf32> to vector<8xf32>
    %78 = vector.shape_cast %77 : vector<8xf32> to vector<8x1xf32>
    %cst_39 = arith.constant 3.200000e+01 : f32
    %79 = vector.broadcast %cst_39 : f32 to vector<8x1xf32>
    %80 = arith.divf %78, %79 : vector<8x1xf32>
    %81 = vector.broadcast %73 : vector<8x1xf32> to vector<8x32xf32>
    %82 = arith.subf %14, %81 : vector<8x32xf32>
    %cst_40 = arith.constant 9.99999974E-5 : f32
    %83 = vector.broadcast %cst_40 : f32 to vector<8x1xf32>
    %84 = arith.addf %80, %83 : vector<8x1xf32>
    %85 = math.rsqrt %84 : vector<8x1xf32>
    %86 = vector.broadcast %85 : vector<8x1xf32> to vector<8x32xf32>
    %87 = arith.mulf %82, %86 : vector<8x32xf32>
    %88 = vector.broadcast %0 : vector<1x32xf32> to vector<8x32xf32>
    %89 = arith.mulf %87, %88 : vector<8x32xf32>
    %90 = vector.broadcast %1 : vector<1x32xf32> to vector<8x32xf32>
    %91 = arith.addf %89, %90 : vector<8x32xf32>
    %cst_41 = arith.constant dense<0.000000e+00> : vector<8x32xf32>
    %92 = tpu.matmul %91, %6, %cst_41 {dimension_numbers = #tpu.dot_dimension_numbers<[1], [0], [0], [1], [0, 0, 1, 1], [], []>} : vector<8x32xf32>, vector<32x32xf32>, vector<8x32xf32> -> vector<8x32xf32>
    %93 = vector.broadcast %2 : vector<1x32xf32> to vector<8x32xf32>
    %94 = arith.addf %92, %93 : vector<8x32xf32>
    %cst_42 = arith.constant 0.000000e+00 : f32
    %95 = vector.broadcast %cst_42 : f32 to vector<8x32xf32>
    %96 = arith.maximumf %94, %95 : vector<8x32xf32>
    %cst_43 = arith.constant dense<0.000000e+00> : vector<8x32xf32>
    %97 = tpu.matmul %96, %8, %cst_43 {dimension_numbers = #tpu.dot_dimension_numbers<[1], [0], [0], [1], [0, 0, 1, 1], [], []>} : vector<8x32xf32>, vector<32x32xf32>, vector<8x32xf32> -> vector<8x32xf32>
    %98 = vector.broadcast %3 : vector<1x32xf32> to vector<8x32xf32>
    %99 = arith.addf %97, %98 : vector<8x32xf32>
    %cst_44 = arith.constant 0.000000e+00 : f32
    %100 = vector.broadcast %cst_44 : f32 to vector<8x32xf32>
    %101 = arith.maximumf %99, %100 : vector<8x32xf32>
    %cst_45 = arith.constant dense<0.000000e+00> : vector<8x32xf32>
    %102 = tpu.matmul %101, %10, %cst_45 {dimension_numbers = #tpu.dot_dimension_numbers<[1], [0], [0], [1], [0, 0, 1, 1], [], []>} : vector<8x32xf32>, vector<32x32xf32>, vector<8x32xf32> -> vector<8x32xf32>
    %103 = vector.broadcast %4 : vector<1x32xf32> to vector<8x32xf32>
    %104 = arith.addf %102, %103 : vector<8x32xf32>
    %cst_46 = arith.constant dense<0.000000e+00> : vector<8x8xf32>
    %105 = tpu.matmul %104, %104, %cst_46 {dimension_numbers = #tpu.dot_dimension_numbers<[1], [1], [0], [0], [0, 0, 1, 0], [], []>} : vector<8x32xf32>, vector<8x32xf32>, vector<8x8xf32> -> vector<8x8xf32>
    %cst_47 = arith.constant 0.176776692 : f32
    %106 = vector.broadcast %cst_47 : f32 to vector<8x8xf32>
    %107 = arith.mulf %105, %106 : vector<8x8xf32>
    %108 = arith.negf %107 : vector<8x8xf32>
    %109 = math.exp %108 : vector<8x8xf32>
    %cst_48 = arith.constant 1.000000e+00 : f32
    %110 = vector.broadcast %cst_48 : f32 to vector<8x8xf32>
    %111 = arith.addf %110, %109 : vector<8x8xf32>
    %112 = arith.divf %110, %111 : vector<8x8xf32>
    %cst_49 = arith.constant 5.000000e-01 : f32
    %113 = vector.broadcast %cst_49 : f32 to vector<8x8xf32>
    %114 = arith.subf %112, %113 : vector<8x8xf32>
    %cst_50 = arith.constant 1.000000e+02 : f32
    %115 = vector.broadcast %cst_50 : f32 to vector<8x8xf32>
    %116 = arith.mulf %114, %115 : vector<8x8xf32>
    %117 = arith.negf %116 : vector<8x8xf32>
    %118 = math.exp %117 : vector<8x8xf32>
    %cst_51 = arith.constant 1.000000e+00 : f32
    %119 = vector.broadcast %cst_51 : f32 to vector<8x8xf32>
    %120 = arith.addf %119, %118 : vector<8x8xf32>
    %121 = arith.divf %119, %120 : vector<8x8xf32>
    %cst_52 = arith.constant 1.000000e+00 : f32
    %122 = vector.broadcast %cst_52 : f32 to vector<8x8xf32>
    %123 = arith.subf %122, %121 : vector<8x8xf32>
    %124 = tpu.concatenate %123, %123, %123, %123, %123, %123, %123, %123 in 1 : vector<8x8xf32>, vector<8x8xf32>, vector<8x8xf32>, vector<8x8xf32>, vector<8x8xf32>, vector<8x8xf32>, vector<8x8xf32>, vector<8x8xf32> -> vector<8x64xf32>
    %125 = tpu.concatenate %69, %124 in 1 : vector<8x64xf32>, vector<8x64xf32> -> vector<8x128xf32>
    %c0_53 = arith.constant 0 : index
    %c0_54 = arith.constant 0 : index
    %126 = vector.load %arg5[%c0_53, %c0_54] : memref<32x128xf32, #tpu.memory_space<vmem>>, vector<8x128xf32>
    %cst_55 = arith.constant 1.000000e+00 : f32
    %127 = vector.broadcast %cst_55 : f32 to vector<8x128xf32>
    %128 = arith.subf %126, %127 : vector<8x128xf32>
    %cst_56 = arith.constant 1.000000e+02 : f32
    %129 = vector.broadcast %cst_56 : f32 to vector<8x128xf32>
    %130 = arith.mulf %128, %129 : vector<8x128xf32>
    %131 = arith.negf %130 : vector<8x128xf32>
    %132 = math.exp %131 : vector<8x128xf32>
    %cst_57 = arith.constant 1.000000e+00 : f32
    %133 = vector.broadcast %cst_57 : f32 to vector<8x128xf32>
    %134 = arith.addf %133, %132 : vector<8x128xf32>
    %135 = arith.divf %133, %134 : vector<8x128xf32>
    %cst_58 = arith.constant 1.000000e+00 : f32
    %136 = vector.broadcast %cst_58 : f32 to vector<8x128xf32>
    %137 = arith.subf %136, %135 : vector<8x128xf32>
    %138 = arith.mulf %125, %137 : vector<8x128xf32>
    %c0_59 = arith.constant 0 : index
    %c0_60 = arith.constant 0 : index
    %139 = vector.load %arg7[%c0_59, %c0_60] : memref<32x128xf32, #tpu.memory_space<vmem>>, vector<8x128xf32>
    tpu.vector_store %arg7[%c0_59, %c0_60], %138 {strides = array<i32>} : memref<32x128xf32, #tpu.memory_space<vmem>>, vector<8x128xf32>,
    %c0_61 = arith.constant 0 : index
    %c0_62 = arith.constant 0 : index
    %c0_63 = arith.constant 0 : index
    %140 = vector.load %arg3[%c0_61, %c0_62, %c0_63] : memref<3x32x32xf32, #tpu.memory_space<vmem>>, vector<1x32x32xf32>
    %141 = vector.shape_cast %140 : vector<1x32x32xf32> to vector<32x32xf32>
    %c0_64 = arith.constant 0 : index
    %c0_65 = arith.constant 0 : index
    %c0_66 = arith.constant 0 : index
    %142 = vector.load %arg4[%c0_64, %c0_65, %c0_66] : memref<3x1x32xf32, #tpu.memory_space<vmem>>, vector<1x1x32xf32>
    %143 = vector.shape_cast %142 : vector<1x1x32xf32> to vector<1x32xf32>
    %cst_67 = arith.constant dense<0.000000e+00> : vector<8x32xf32>
    %144 = tpu.matmul %12, %141, %cst_67 {dimension_numbers = #tpu.dot_dimension_numbers<[1], [0], [0], [1], [0, 0, 1, 1], [], []>} : vector<8x32xf32>, vector<32x32xf32>, vector<8x32xf32> -> vector<8x32xf32>
    %145 = vector.broadcast %143 : vector<1x32xf32> to vector<8x32xf32>
    %146 = arith.addf %144, %145 : vector<8x32xf32>
    %cst_68 = arith.constant 0.000000e+00 : f32
    %147 = vector.broadcast %cst_68 : f32 to vector<8x32xf32>
    %148 = arith.maximumf %146, %147 : vector<8x32xf32>
    %149 = arith.addf %12, %148 : vector<8x32xf32>
    %cst_69 = arith.constant dense<0.000000e+00> : vector<8x32xf32>
    %150 = tpu.matmul %14, %141, %cst_69 {dimension_numbers = #tpu.dot_dimension_numbers<[1], [0], [0], [1], [0, 0, 1, 1], [], []>} : vector<8x32xf32>, vector<32x32xf32>, vector<8x32xf32> -> vector<8x32xf32>
    %151 = vector.broadcast %143 : vector<1x32xf32> to vector<8x32xf32>
    %152 = arith.addf %150, %151 : vector<8x32xf32>
    %cst_70 = arith.constant 0.000000e+00 : f32
    %153 = vector.broadcast %cst_70 : f32 to vector<8x32xf32>
    %154 = arith.maximumf %152, %153 : vector<8x32xf32>
    %155 = arith.addf %14, %154 : vector<8x32xf32>
    %cst_71 = arith.constant dense<0.000000e+00> : vector<8xf32>
    %156 = vector.multi_reduction <add>, %149, %cst_71 [1] : vector<8x32xf32> to vector<8xf32>
    %157 = vector.shape_cast %156 : vector<8xf32> to vector<8x1xf32>
    %cst_72 = arith.constant 3.200000e+01 : f32
    %158 = vector.broadcast %cst_72 : f32 to vector<8x1xf32>
    %159 = arith.divf %157, %158 : vector<8x1xf32>
    %160 = vector.broadcast %159 : vector<8x1xf32> to vector<8x32xf32>
    %161 = arith.subf %149, %160 : vector<8x32xf32>
    %162 = arith.mulf %161, %161 : vector<8x32xf32>
    %cst_73 = arith.constant dense<0.000000e+00> : vector<8xf32>
    %163 = vector.multi_reduction <add>, %162, %cst_73 [1] : vector<8x32xf32> to vector<8xf32>
    %164 = vector.shape_cast %163 : vector<8xf32> to vector<8x1xf32>
    %cst_74 = arith.constant 3.200000e+01 : f32
    %165 = vector.broadcast %cst_74 : f32 to vector<8x1xf32>
    %166 = arith.divf %164, %165 : vector<8x1xf32>
    %167 = vector.broadcast %159 : vector<8x1xf32> to vector<8x32xf32>
    %168 = arith.subf %149, %167 : vector<8x32xf32>
    %cst_75 = arith.constant 9.99999974E-5 : f32
    %169 = vector.broadcast %cst_75 : f32 to vector<8x1xf32>
    %170 = arith.addf %166, %169 : vector<8x1xf32>
    %171 = math.rsqrt %170 : vector<8x1xf32>
    %172 = vector.broadcast %171 : vector<8x1xf32> to vector<8x32xf32>
    %173 = arith.mulf %168, %172 : vector<8x32xf32>
    %174 = vector.broadcast %0 : vector<1x32xf32> to vector<8x32xf32>
    %175 = arith.mulf %173, %174 : vector<8x32xf32>
    %176 = vector.broadcast %1 : vector<1x32xf32> to vector<8x32xf32>
    %177 = arith.addf %175, %176 : vector<8x32xf32>
    %cst_76 = arith.constant dense<0.000000e+00> : vector<8x32xf32>
    %178 = tpu.matmul %177, %6, %cst_76 {dimension_numbers = #tpu.dot_dimension_numbers<[1], [0], [0], [1], [0, 0, 1, 1], [], []>} : vector<8x32xf32>, vector<32x32xf32>, vector<8x32xf32> -> vector<8x32xf32>
    %179 = vector.broadcast %2 : vector<1x32xf32> to vector<8x32xf32>
    %180 = arith.addf %178, %179 : vector<8x32xf32>
    %cst_77 = arith.constant 0.000000e+00 : f32
    %181 = vector.broadcast %cst_77 : f32 to vector<8x32xf32>
    %182 = arith.maximumf %180, %181 : vector<8x32xf32>
    %cst_78 = arith.constant dense<0.000000e+00> : vector<8x32xf32>
    %183 = tpu.matmul %182, %8, %cst_78 {dimension_numbers = #tpu.dot_dimension_numbers<[1], [0], [0], [1], [0, 0, 1, 1], [], []>} : vector<8x32xf32>, vector<32x32xf32>, vector<8x32xf32> -> vector<8x32xf32>
    %184 = vector.broadcast %3 : vector<1x32xf32> to vector<8x32xf32>
    %185 = arith.addf %183, %184 : vector<8x32xf32>
    %cst_79 = arith.constant 0.000000e+00 : f32
    %186 = vector.broadcast %cst_79 : f32 to vector<8x32xf32>
    %187 = arith.maximumf %185, %186 : vector<8x32xf32>
    %cst_80 = arith.constant dense<0.000000e+00> : vector<8x32xf32>
    %188 = tpu.matmul %187, %10, %cst_80 {dimension_numbers = #tpu.dot_dimension_numbers<[1], [0], [0], [1], [0, 0, 1, 1], [], []>} : vector<8x32xf32>, vector<32x32xf32>, vector<8x32xf32> -> vector<8x32xf32>
    %189 = vector.broadcast %4 : vector<1x32xf32> to vector<8x32xf32>
    %190 = arith.addf %188, %189 : vector<8x32xf32>
    %cst_81 = arith.constant dense<0.000000e+00> : vector<8x8xf32>
    %191 = tpu.matmul %190, %190, %cst_81 {dimension_numbers = #tpu.dot_dimension_numbers<[1], [1], [0], [0], [0, 0, 1, 0], [], []>} : vector<8x32xf32>, vector<8x32xf32>, vector<8x8xf32> -> vector<8x8xf32>
    %cst_82 = arith.constant 0.176776692 : f32
    %192 = vector.broadcast %cst_82 : f32 to vector<8x8xf32>
    %193 = arith.mulf %191, %192 : vector<8x8xf32>
    %194 = arith.negf %193 : vector<8x8xf32>
    %195 = math.exp %194 : vector<8x8xf32>
    %cst_83 = arith.constant 1.000000e+00 : f32
    %196 = vector.broadcast %cst_83 : f32 to vector<8x8xf32>
    %197 = arith.addf %196, %195 : vector<8x8xf32>
    %198 = arith.divf %196, %197 : vector<8x8xf32>
    %cst_84 = arith.constant 5.000000e-01 : f32
    %199 = vector.broadcast %cst_84 : f32 to vector<8x8xf32>
    %200 = arith.subf %198, %199 : vector<8x8xf32>
    %cst_85 = arith.constant 1.000000e+02 : f32
    %201 = vector.broadcast %cst_85 : f32 to vector<8x8xf32>
    %202 = arith.mulf %200, %201 : vector<8x8xf32>
    %203 = arith.negf %202 : vector<8x8xf32>
    %204 = math.exp %203 : vector<8x8xf32>
    %cst_86 = arith.constant 1.000000e+00 : f32
    %205 = vector.broadcast %cst_86 : f32 to vector<8x8xf32>
    %206 = arith.addf %205, %204 : vector<8x8xf32>
    %207 = arith.divf %205, %206 : vector<8x8xf32>
    %cst_87 = arith.constant 1.000000e+00 : f32
    %208 = vector.broadcast %cst_87 : f32 to vector<8x8xf32>
    %209 = arith.subf %208, %207 : vector<8x8xf32>
    %210 = tpu.concatenate %209, %209, %209, %209, %209, %209, %209, %209 in 1 : vector<8x8xf32>, vector<8x8xf32>, vector<8x8xf32>, vector<8x8xf32>, vector<8x8xf32>, vector<8x8xf32>, vector<8x8xf32>, vector<8x8xf32> -> vector<8x64xf32>
    %cst_88 = arith.constant dense<0.000000e+00> : vector<8xf32>
    %211 = vector.multi_reduction <add>, %155, %cst_88 [1] : vector<8x32xf32> to vector<8xf32>
    %212 = vector.shape_cast %211 : vector<8xf32> to vector<8x1xf32>
    %cst_89 = arith.constant 3.200000e+01 : f32
    %213 = vector.broadcast %cst_89 : f32 to vector<8x1xf32>
    %214 = arith.divf %212, %213 : vector<8x1xf32>
    %215 = vector.broadcast %214 : vector<8x1xf32> to vector<8x32xf32>
    %216 = arith.subf %155, %215 : vector<8x32xf32>
    %217 = arith.mulf %216, %216 : vector<8x32xf32>
    %cst_90 = arith.constant dense<0.000000e+00> : vector<8xf32>
    %218 = vector.multi_reduction <add>, %217, %cst_90 [1] : vector<8x32xf32> to vector<8xf32>
    %219 = vector.shape_cast %218 : vector<8xf32> to vector<8x1xf32>
    %cst_91 = arith.constant 3.200000e+01 : f32
    %220 = vector.broadcast %cst_91 : f32 to vector<8x1xf32>
    %221 = arith.divf %219, %220 : vector<8x1xf32>
    %222 = vector.broadcast %214 : vector<8x1xf32> to vector<8x32xf32>
    %223 = arith.subf %155, %222 : vector<8x32xf32>
    %cst_92 = arith.constant 9.99999974E-5 : f32
    %224 = vector.broadcast %cst_92 : f32 to vector<8x1xf32>
    %225 = arith.addf %221, %224 : vector<8x1xf32>
    %226 = math.rsqrt %225 : vector<8x1xf32>
    %227 = vector.broadcast %226 : vector<8x1xf32> to vector<8x32xf32>
    %228 = arith.mulf %223, %227 : vector<8x32xf32>
    %229 = vector.broadcast %0 : vector<1x32xf32> to vector<8x32xf32>
    %230 = arith.mulf %228, %229 : vector<8x32xf32>
    %231 = vector.broadcast %1 : vector<1x32xf32> to vector<8x32xf32>
    %232 = arith.addf %230, %231 : vector<8x32xf32>
    %cst_93 = arith.constant dense<0.000000e+00> : vector<8x32xf32>
    %233 = tpu.matmul %232, %6, %cst_93 {dimension_numbers = #tpu.dot_dimension_numbers<[1], [0], [0], [1], [0, 0, 1, 1], [], []>} : vector<8x32xf32>, vector<32x32xf32>, vector<8x32xf32> -> vector<8x32xf32>
    %234 = vector.broadcast %2 : vector<1x32xf32> to vector<8x32xf32>
    %235 = arith.addf %233, %234 : vector<8x32xf32>
    %cst_94 = arith.constant 0.000000e+00 : f32
    %236 = vector.broadcast %cst_94 : f32 to vector<8x32xf32>
    %237 = arith.maximumf %235, %236 : vector<8x32xf32>
    %cst_95 = arith.constant dense<0.000000e+00> : vector<8x32xf32>
    %238 = tpu.matmul %237, %8, %cst_95 {dimension_numbers = #tpu.dot_dimension_numbers<[1], [0], [0], [1], [0, 0, 1, 1], [], []>} : vector<8x32xf32>, vector<32x32xf32>, vector<8x32xf32> -> vector<8x32xf32>
    %239 = vector.broadcast %3 : vector<1x32xf32> to vector<8x32xf32>
    %240 = arith.addf %238, %239 : vector<8x32xf32>
    %cst_96 = arith.constant 0.000000e+00 : f32
    %241 = vector.broadcast %cst_96 : f32 to vector<8x32xf32>
    %242 = arith.maximumf %240, %241 : vector<8x32xf32>
    %cst_97 = arith.constant dense<0.000000e+00> : vector<8x32xf32>
    %243 = tpu.matmul %242, %10, %cst_97 {dimension_numbers = #tpu.dot_dimension_numbers<[1], [0], [0], [1], [0, 0, 1, 1], [], []>} : vector<8x32xf32>, vector<32x32xf32>, vector<8x32xf32> -> vector<8x32xf32>
    %244 = vector.broadcast %4 : vector<1x32xf32> to vector<8x32xf32>
    %245 = arith.addf %243, %244 : vector<8x32xf32>
    %cst_98 = arith.constant dense<0.000000e+00> : vector<8x8xf32>
    %246 = tpu.matmul %245, %245, %cst_98 {dimension_numbers = #tpu.dot_dimension_numbers<[1], [1], [0], [0], [0, 0, 1, 0], [], []>} : vector<8x32xf32>, vector<8x32xf32>, vector<8x8xf32> -> vector<8x8xf32>
    %cst_99 = arith.constant 0.176776692 : f32
    %247 = vector.broadcast %cst_99 : f32 to vector<8x8xf32>
    %248 = arith.mulf %246, %247 : vector<8x8xf32>
    %249 = arith.negf %248 : vector<8x8xf32>
    %250 = math.exp %249 : vector<8x8xf32>
    %cst_100 = arith.constant 1.000000e+00 : f32
    %251 = vector.broadcast %cst_100 : f32 to vector<8x8xf32>
    %252 = arith.addf %251, %250 : vector<8x8xf32>
    %253 = arith.divf %251, %252 : vector<8x8xf32>
    %cst_101 = arith.constant 5.000000e-01 : f32
    %254 = vector.broadcast %cst_101 : f32 to vector<8x8xf32>
    %255 = arith.subf %253, %254 : vector<8x8xf32>
    %cst_102 = arith.constant 1.000000e+02 : f32
    %256 = vector.broadcast %cst_102 : f32 to vector<8x8xf32>
    %257 = arith.mulf %255, %256 : vector<8x8xf32>
    %258 = arith.negf %257 : vector<8x8xf32>
    %259 = math.exp %258 : vector<8x8xf32>
    %cst_103 = arith.constant 1.000000e+00 : f32
    %260 = vector.broadcast %cst_103 : f32 to vector<8x8xf32>
    %261 = arith.addf %260, %259 : vector<8x8xf32>
    %262 = arith.divf %260, %261 : vector<8x8xf32>
    %cst_104 = arith.constant 1.000000e+00 : f32
    %263 = vector.broadcast %cst_104 : f32 to vector<8x8xf32>
    %264 = arith.subf %263, %262 : vector<8x8xf32>
    %265 = tpu.concatenate %264, %264, %264, %264, %264, %264, %264, %264 in 1 : vector<8x8xf32>, vector<8x8xf32>, vector<8x8xf32>, vector<8x8xf32>, vector<8x8xf32>, vector<8x8xf32>, vector<8x8xf32>, vector<8x8xf32> -> vector<8x64xf32>
    %266 = tpu.concatenate %210, %265 in 1 : vector<8x64xf32>, vector<8x64xf32> -> vector<8x128xf32>
    %c8 = arith.constant 8 : index
    %c0_105 = arith.constant 0 : index
    %267 = vector.load %arg5[%c8, %c0_105] : memref<32x128xf32, #tpu.memory_space<vmem>>, vector<8x128xf32>
    %cst_106 = arith.constant 1.000000e+00 : f32
    %268 = vector.broadcast %cst_106 : f32 to vector<8x128xf32>
    %269 = arith.subf %267, %268 : vector<8x128xf32>
    %cst_107 = arith.constant 1.000000e+02 : f32
    %270 = vector.broadcast %cst_107 : f32 to vector<8x128xf32>
    %271 = arith.mulf %269, %270 : vector<8x128xf32>
    %272 = arith.negf %271 : vector<8x128xf32>
    %273 = math.exp %272 : vector<8x128xf32>
    %cst_108 = arith.constant 1.000000e+00 : f32
    %274 = vector.broadcast %cst_108 : f32 to vector<8x128xf32>
    %275 = arith.addf %274, %273 : vector<8x128xf32>
    %276 = arith.divf %274, %275 : vector<8x128xf32>
    %cst_109 = arith.constant 1.000000e+00 : f32
    %277 = vector.broadcast %cst_109 : f32 to vector<8x128xf32>
    %278 = arith.subf %277, %276 : vector<8x128xf32>
    %279 = arith.mulf %266, %278 : vector<8x128xf32>
    %c8_110 = arith.constant 8 : index
    %c0_111 = arith.constant 0 : index
    %280 = vector.load %arg7[%c8_110, %c0_111] : memref<32x128xf32, #tpu.memory_space<vmem>>, vector<8x128xf32>
    tpu.vector_store %arg7[%c8_110, %c0_111], %279 {strides = array<i32>} : memref<32x128xf32, #tpu.memory_space<vmem>>, vector<8x128xf32>,
    %c1_112 = arith.constant 1 : index
    %c0_113 = arith.constant 0 : index
    %c0_114 = arith.constant 0 : index
    %281 = vector.load %arg3[%c1_112, %c0_113, %c0_114] : memref<3x32x32xf32, #tpu.memory_space<vmem>>, vector<1x32x32xf32>
    %282 = vector.shape_cast %281 : vector<1x32x32xf32> to vector<32x32xf32>
    %c1_115 = arith.constant 1 : index
    %c0_116 = arith.constant 0 : index
    %c0_117 = arith.constant 0 : index
    %283 = vector.load %arg4[%c1_115, %c0_116, %c0_117] : memref<3x1x32xf32, #tpu.memory_space<vmem>>, vector<1x1x32xf32>
    %284 = vector.shape_cast %283 : vector<1x1x32xf32> to vector<1x32xf32>
    %cst_118 = arith.constant dense<0.000000e+00> : vector<8x32xf32>
    %285 = tpu.matmul %149, %282, %cst_118 {dimension_numbers = #tpu.dot_dimension_numbers<[1], [0], [0], [1], [0, 0, 1, 1], [], []>} : vector<8x32xf32>, vector<32x32xf32>, vector<8x32xf32> -> vector<8x32xf32>
    %286 = vector.broadcast %284 : vector<1x32xf32> to vector<8x32xf32>
    %287 = arith.addf %285, %286 : vector<8x32xf32>
    %cst_119 = arith.constant 0.000000e+00 : f32
    %288 = vector.broadcast %cst_119 : f32 to vector<8x32xf32>
    %289 = arith.maximumf %287, %288 : vector<8x32xf32>
    %290 = arith.addf %149, %289 : vector<8x32xf32>
    %cst_120 = arith.constant dense<0.000000e+00> : vector<8x32xf32>
    %291 = tpu.matmul %155, %282, %cst_120 {dimension_numbers = #tpu.dot_dimension_numbers<[1], [0], [0], [1], [0, 0, 1, 1], [], []>} : vector<8x32xf32>, vector<32x32xf32>, vector<8x32xf32> -> vector<8x32xf32>
    %292 = vector.broadcast %284 : vector<1x32xf32> to vector<8x32xf32>
    %293 = arith.addf %291, %292 : vector<8x32xf32>
    %cst_121 = arith.constant 0.000000e+00 : f32
    %294 = vector.broadcast %cst_121 : f32 to vector<8x32xf32>
    %295 = arith.maximumf %293, %294 : vector<8x32xf32>
    %296 = arith.addf %155, %295 : vector<8x32xf32>
    %cst_122 = arith.constant dense<0.000000e+00> : vector<8xf32>
    %297 = vector.multi_reduction <add>, %290, %cst_122 [1] : vector<8x32xf32> to vector<8xf32>
    %298 = vector.shape_cast %297 : vector<8xf32> to vector<8x1xf32>
    %cst_123 = arith.constant 3.200000e+01 : f32
    %299 = vector.broadcast %cst_123 : f32 to vector<8x1xf32>
    %300 = arith.divf %298, %299 : vector<8x1xf32>
    %301 = vector.broadcast %300 : vector<8x1xf32> to vector<8x32xf32>
    %302 = arith.subf %290, %301 : vector<8x32xf32>
    %303 = arith.mulf %302, %302 : vector<8x32xf32>
    %cst_124 = arith.constant dense<0.000000e+00> : vector<8xf32>
    %304 = vector.multi_reduction <add>, %303, %cst_124 [1] : vector<8x32xf32> to vector<8xf32>
    %305 = vector.shape_cast %304 : vector<8xf32> to vector<8x1xf32>
    %cst_125 = arith.constant 3.200000e+01 : f32
    %306 = vector.broadcast %cst_125 : f32 to vector<8x1xf32>
    %307 = arith.divf %305, %306 : vector<8x1xf32>
    %308 = vector.broadcast %300 : vector<8x1xf32> to vector<8x32xf32>
    %309 = arith.subf %290, %308 : vector<8x32xf32>
    %cst_126 = arith.constant 9.99999974E-5 : f32
    %310 = vector.broadcast %cst_126 : f32 to vector<8x1xf32>
    %311 = arith.addf %307, %310 : vector<8x1xf32>
    %312 = math.rsqrt %311 : vector<8x1xf32>
    %313 = vector.broadcast %312 : vector<8x1xf32> to vector<8x32xf32>
    %314 = arith.mulf %309, %313 : vector<8x32xf32>
    %315 = vector.broadcast %0 : vector<1x32xf32> to vector<8x32xf32>
    %316 = arith.mulf %314, %315 : vector<8x32xf32>
    %317 = vector.broadcast %1 : vector<1x32xf32> to vector<8x32xf32>
    %318 = arith.addf %316, %317 : vector<8x32xf32>
    %cst_127 = arith.constant dense<0.000000e+00> : vector<8x32xf32>
    %319 = tpu.matmul %318, %6, %cst_127 {dimension_numbers = #tpu.dot_dimension_numbers<[1], [0], [0], [1], [0, 0, 1, 1], [], []>} : vector<8x32xf32>, vector<32x32xf32>, vector<8x32xf32> -> vector<8x32xf32>
    %320 = vector.broadcast %2 : vector<1x32xf32> to vector<8x32xf32>
    %321 = arith.addf %319, %320 : vector<8x32xf32>
    %cst_128 = arith.constant 0.000000e+00 : f32
    %322 = vector.broadcast %cst_128 : f32 to vector<8x32xf32>
    %323 = arith.maximumf %321, %322 : vector<8x32xf32>
    %cst_129 = arith.constant dense<0.000000e+00> : vector<8x32xf32>
    %324 = tpu.matmul %323, %8, %cst_129 {dimension_numbers = #tpu.dot_dimension_numbers<[1], [0], [0], [1], [0, 0, 1, 1], [], []>} : vector<8x32xf32>, vector<32x32xf32>, vector<8x32xf32> -> vector<8x32xf32>
    %325 = vector.broadcast %3 : vector<1x32xf32> to vector<8x32xf32>
    %326 = arith.addf %324, %325 : vector<8x32xf32>
    %cst_130 = arith.constant 0.000000e+00 : f32
    %327 = vector.broadcast %cst_130 : f32 to vector<8x32xf32>
    %328 = arith.maximumf %326, %327 : vector<8x32xf32>
    %cst_131 = arith.constant dense<0.000000e+00> : vector<8x32xf32>
    %329 = tpu.matmul %328, %10, %cst_131 {dimension_numbers = #tpu.dot_dimension_numbers<[1], [0], [0], [1], [0, 0, 1, 1], [], []>} : vector<8x32xf32>, vector<32x32xf32>, vector<8x32xf32> -> vector<8x32xf32>
    %330 = vector.broadcast %4 : vector<1x32xf32> to vector<8x32xf32>
    %331 = arith.addf %329, %330 : vector<8x32xf32>
    %cst_132 = arith.constant dense<0.000000e+00> : vector<8x8xf32>
    %332 = tpu.matmul %331, %331, %cst_132 {dimension_numbers = #tpu.dot_dimension_numbers<[1], [1], [0], [0], [0, 0, 1, 0], [], []>} : vector<8x32xf32>, vector<8x32xf32>, vector<8x8xf32> -> vector<8x8xf32>
    %cst_133 = arith.constant 0.176776692 : f32
    %333 = vector.broadcast %cst_133 : f32 to vector<8x8xf32>
    %334 = arith.mulf %332, %333 : vector<8x8xf32>
    %335 = arith.negf %334 : vector<8x8xf32>
    %336 = math.exp %335 : vector<8x8xf32>
    %cst_134 = arith.constant 1.000000e+00 : f32
    %337 = vector.broadcast %cst_134 : f32 to vector<8x8xf32>
    %338 = arith.addf %337, %336 : vector<8x8xf32>
    %339 = arith.divf %337, %338 : vector<8x8xf32>
    %cst_135 = arith.constant 5.000000e-01 : f32
    %340 = vector.broadcast %cst_135 : f32 to vector<8x8xf32>
    %341 = arith.subf %339, %340 : vector<8x8xf32>
    %cst_136 = arith.constant 1.000000e+02 : f32
    %342 = vector.broadcast %cst_136 : f32 to vector<8x8xf32>
    %343 = arith.mulf %341, %342 : vector<8x8xf32>
    %344 = arith.negf %343 : vector<8x8xf32>
    %345 = math.exp %344 : vector<8x8xf32>
    %cst_137 = arith.constant 1.000000e+00 : f32
    %346 = vector.broadcast %cst_137 : f32 to vector<8x8xf32>
    %347 = arith.addf %346, %345 : vector<8x8xf32>
    %348 = arith.divf %346, %347 : vector<8x8xf32>
    %cst_138 = arith.constant 1.000000e+00 : f32
    %349 = vector.broadcast %cst_138 : f32 to vector<8x8xf32>
    %350 = arith.subf %349, %348 : vector<8x8xf32>
    %351 = tpu.concatenate %350, %350, %350, %350, %350, %350, %350, %350 in 1 : vector<8x8xf32>, vector<8x8xf32>, vector<8x8xf32>, vector<8x8xf32>, vector<8x8xf32>, vector<8x8xf32>, vector<8x8xf32>, vector<8x8xf32> -> vector<8x64xf32>
    %cst_139 = arith.constant dense<0.000000e+00> : vector<8xf32>
    %352 = vector.multi_reduction <add>, %296, %cst_139 [1] : vector<8x32xf32> to vector<8xf32>
    %353 = vector.shape_cast %352 : vector<8xf32> to vector<8x1xf32>
    %cst_140 = arith.constant 3.200000e+01 : f32
    %354 = vector.broadcast %cst_140 : f32 to vector<8x1xf32>
    %355 = arith.divf %353, %354 : vector<8x1xf32>
    %356 = vector.broadcast %355 : vector<8x1xf32> to vector<8x32xf32>
    %357 = arith.subf %296, %356 : vector<8x32xf32>
    %358 = arith.mulf %357, %357 : vector<8x32xf32>
    %cst_141 = arith.constant dense<0.000000e+00> : vector<8xf32>
    %359 = vector.multi_reduction <add>, %358, %cst_141 [1] : vector<8x32xf32> to vector<8xf32>
    %360 = vector.shape_cast %359 : vector<8xf32> to vector<8x1xf32>
    %cst_142 = arith.constant 3.200000e+01 : f32
    %361 = vector.broadcast %cst_142 : f32 to vector<8x1xf32>
    %362 = arith.divf %360, %361 : vector<8x1xf32>
    %363 = vector.broadcast %355 : vector<8x1xf32> to vector<8x32xf32>
    %364 = arith.subf %296, %363 : vector<8x32xf32>
    %cst_143 = arith.constant 9.99999974E-5 : f32
    %365 = vector.broadcast %cst_143 : f32 to vector<8x1xf32>
    %366 = arith.addf %362, %365 : vector<8x1xf32>
    %367 = math.rsqrt %366 : vector<8x1xf32>
    %368 = vector.broadcast %367 : vector<8x1xf32> to vector<8x32xf32>
    %369 = arith.mulf %364, %368 : vector<8x32xf32>
    %370 = vector.broadcast %0 : vector<1x32xf32> to vector<8x32xf32>
    %371 = arith.mulf %369, %370 : vector<8x32xf32>
    %372 = vector.broadcast %1 : vector<1x32xf32> to vector<8x32xf32>
    %373 = arith.addf %371, %372 : vector<8x32xf32>
    %cst_144 = arith.constant dense<0.000000e+00> : vector<8x32xf32>
    %374 = tpu.matmul %373, %6, %cst_144 {dimension_numbers = #tpu.dot_dimension_numbers<[1], [0], [0], [1], [0, 0, 1, 1], [], []>} : vector<8x32xf32>, vector<32x32xf32>, vector<8x32xf32> -> vector<8x32xf32>
    %375 = vector.broadcast %2 : vector<1x32xf32> to vector<8x32xf32>
    %376 = arith.addf %374, %375 : vector<8x32xf32>
    %cst_145 = arith.constant 0.000000e+00 : f32
    %377 = vector.broadcast %cst_145 : f32 to vector<8x32xf32>
    %378 = arith.maximumf %376, %377 : vector<8x32xf32>
    %cst_146 = arith.constant dense<0.000000e+00> : vector<8x32xf32>
    %379 = tpu.matmul %378, %8, %cst_146 {dimension_numbers = #tpu.dot_dimension_numbers<[1], [0], [0], [1], [0, 0, 1, 1], [], []>} : vector<8x32xf32>, vector<32x32xf32>, vector<8x32xf32> -> vector<8x32xf32>
    %380 = vector.broadcast %3 : vector<1x32xf32> to vector<8x32xf32>
    %381 = arith.addf %379, %380 : vector<8x32xf32>
    %cst_147 = arith.constant 0.000000e+00 : f32
    %382 = vector.broadcast %cst_147 : f32 to vector<8x32xf32>
    %383 = arith.maximumf %381, %382 : vector<8x32xf32>
    %cst_148 = arith.constant dense<0.000000e+00> : vector<8x32xf32>
    %384 = tpu.matmul %383, %10, %cst_148 {dimension_numbers = #tpu.dot_dimension_numbers<[1], [0], [0], [1], [0, 0, 1, 1], [], []>} : vector<8x32xf32>, vector<32x32xf32>, vector<8x32xf32> -> vector<8x32xf32>
    %385 = vector.broadcast %4 : vector<1x32xf32> to vector<8x32xf32>
    %386 = arith.addf %384, %385 : vector<8x32xf32>
    %cst_149 = arith.constant dense<0.000000e+00> : vector<8x8xf32>
    %387 = tpu.matmul %386, %386, %cst_149 {dimension_numbers = #tpu.dot_dimension_numbers<[1], [1], [0], [0], [0, 0, 1, 0], [], []>} : vector<8x32xf32>, vector<8x32xf32>, vector<8x8xf32> -> vector<8x8xf32>
    %cst_150 = arith.constant 0.176776692 : f32
    %388 = vector.broadcast %cst_150 : f32 to vector<8x8xf32>
    %389 = arith.mulf %387, %388 : vector<8x8xf32>
    %390 = arith.negf %389 : vector<8x8xf32>
    %391 = math.exp %390 : vector<8x8xf32>
    %cst_151 = arith.constant 1.000000e+00 : f32
    %392 = vector.broadcast %cst_151 : f32 to vector<8x8xf32>
    %393 = arith.addf %392, %391 : vector<8x8xf32>
    %394 = arith.divf %392, %393 : vector<8x8xf32>
    %cst_152 = arith.constant 5.000000e-01 : f32
    %395 = vector.broadcast %cst_152 : f32 to vector<8x8xf32>
    %396 = arith.subf %394, %395 : vector<8x8xf32>
    %cst_153 = arith.constant 1.000000e+02 : f32
    %397 = vector.broadcast %cst_153 : f32 to vector<8x8xf32>
    %398 = arith.mulf %396, %397 : vector<8x8xf32>
    %399 = arith.negf %398 : vector<8x8xf32>
    %400 = math.exp %399 : vector<8x8xf32>
    %cst_154 = arith.constant 1.000000e+00 : f32
    %401 = vector.broadcast %cst_154 : f32 to vector<8x8xf32>
    %402 = arith.addf %401, %400 : vector<8x8xf32>
    %403 = arith.divf %401, %402 : vector<8x8xf32>
    %cst_155 = arith.constant 1.000000e+00 : f32
    %404 = vector.broadcast %cst_155 : f32 to vector<8x8xf32>
    %405 = arith.subf %404, %403 : vector<8x8xf32>
    %406 = tpu.concatenate %405, %405, %405, %405, %405, %405, %405, %405 in 1 : vector<8x8xf32>, vector<8x8xf32>, vector<8x8xf32>, vector<8x8xf32>, vector<8x8xf32>, vector<8x8xf32>, vector<8x8xf32>, vector<8x8xf32> -> vector<8x64xf32>
    %407 = tpu.concatenate %351, %406 in 1 : vector<8x64xf32>, vector<8x64xf32> -> vector<8x128xf32>
    %c16 = arith.constant 16 : index
    %c0_156 = arith.constant 0 : index
    %408 = vector.load %arg5[%c16, %c0_156] : memref<32x128xf32, #tpu.memory_space<vmem>>, vector<8x128xf32>
    %cst_157 = arith.constant 1.000000e+00 : f32
    %409 = vector.broadcast %cst_157 : f32 to vector<8x128xf32>
    %410 = arith.subf %408, %409 : vector<8x128xf32>
    %cst_158 = arith.constant 1.000000e+02 : f32
    %411 = vector.broadcast %cst_158 : f32 to vector<8x128xf32>
    %412 = arith.mulf %410, %411 : vector<8x128xf32>
    %413 = arith.negf %412 : vector<8x128xf32>
    %414 = math.exp %413 : vector<8x128xf32>
    %cst_159 = arith.constant 1.000000e+00 : f32
    %415 = vector.broadcast %cst_159 : f32 to vector<8x128xf32>
    %416 = arith.addf %415, %414 : vector<8x128xf32>
    %417 = arith.divf %415, %416 : vector<8x128xf32>
    %cst_160 = arith.constant 1.000000e+00 : f32
    %418 = vector.broadcast %cst_160 : f32 to vector<8x128xf32>
    %419 = arith.subf %418, %417 : vector<8x128xf32>
    %420 = arith.mulf %407, %419 : vector<8x128xf32>
    %c16_161 = arith.constant 16 : index
    %c0_162 = arith.constant 0 : index
    %421 = vector.load %arg7[%c16_161, %c0_162] : memref<32x128xf32, #tpu.memory_space<vmem>>, vector<8x128xf32>
    tpu.vector_store %arg7[%c16_161, %c0_162], %420 {strides = array<i32>} : memref<32x128xf32, #tpu.memory_space<vmem>>, vector<8x128xf32>,
    %c2_163 = arith.constant 2 : index
    %c0_164 = arith.constant 0 : index
    %c0_165 = arith.constant 0 : index
    %422 = vector.load %arg3[%c2_163, %c0_164, %c0_165] : memref<3x32x32xf32, #tpu.memory_space<vmem>>, vector<1x32x32xf32>
    %423 = vector.shape_cast %422 : vector<1x32x32xf32> to vector<32x32xf32>
    %c2_166 = arith.constant 2 : index
    %c0_167 = arith.constant 0 : index
    %c0_168 = arith.constant 0 : index
    %424 = vector.load %arg4[%c2_166, %c0_167, %c0_168] : memref<3x1x32xf32, #tpu.memory_space<vmem>>, vector<1x1x32xf32>
    %425 = vector.shape_cast %424 : vector<1x1x32xf32> to vector<1x32xf32>
    %cst_169 = arith.constant dense<0.000000e+00> : vector<8x32xf32>
    %426 = tpu.matmul %290, %423, %cst_169 {dimension_numbers = #tpu.dot_dimension_numbers<[1], [0], [0], [1], [0, 0, 1, 1], [], []>} : vector<8x32xf32>, vector<32x32xf32>, vector<8x32xf32> -> vector<8x32xf32>
    %427 = vector.broadcast %425 : vector<1x32xf32> to vector<8x32xf32>
    %428 = arith.addf %426, %427 : vector<8x32xf32>
    %cst_170 = arith.constant 0.000000e+00 : f32
    %429 = vector.broadcast %cst_170 : f32 to vector<8x32xf32>
    %430 = arith.maximumf %428, %429 : vector<8x32xf32>
    %431 = arith.addf %290, %430 : vector<8x32xf32>
    %cst_171 = arith.constant dense<0.000000e+00> : vector<8x32xf32>
    %432 = tpu.matmul %296, %423, %cst_171 {dimension_numbers = #tpu.dot_dimension_numbers<[1], [0], [0], [1], [0, 0, 1, 1], [], []>} : vector<8x32xf32>, vector<32x32xf32>, vector<8x32xf32> -> vector<8x32xf32>
    %433 = vector.broadcast %425 : vector<1x32xf32> to vector<8x32xf32>
    %434 = arith.addf %432, %433 : vector<8x32xf32>
    %cst_172 = arith.constant 0.000000e+00 : f32
    %435 = vector.broadcast %cst_172 : f32 to vector<8x32xf32>
    %436 = arith.maximumf %434, %435 : vector<8x32xf32>
    %437 = arith.addf %296, %436 : vector<8x32xf32>
    %cst_173 = arith.constant dense<0.000000e+00> : vector<8xf32>
    %438 = vector.multi_reduction <add>, %431, %cst_173 [1] : vector<8x32xf32> to vector<8xf32>
    %439 = vector.shape_cast %438 : vector<8xf32> to vector<8x1xf32>
    %cst_174 = arith.constant 3.200000e+01 : f32
    %440 = vector.broadcast %cst_174 : f32 to vector<8x1xf32>
    %441 = arith.divf %439, %440 : vector<8x1xf32>
    %442 = vector.broadcast %441 : vector<8x1xf32> to vector<8x32xf32>
    %443 = arith.subf %431, %442 : vector<8x32xf32>
    %444 = arith.mulf %443, %443 : vector<8x32xf32>
    %cst_175 = arith.constant dense<0.000000e+00> : vector<8xf32>
    %445 = vector.multi_reduction <add>, %444, %cst_175 [1] : vector<8x32xf32> to vector<8xf32>
    %446 = vector.shape_cast %445 : vector<8xf32> to vector<8x1xf32>
    %cst_176 = arith.constant 3.200000e+01 : f32
    %447 = vector.broadcast %cst_176 : f32 to vector<8x1xf32>
    %448 = arith.divf %446, %447 : vector<8x1xf32>
    %449 = vector.broadcast %441 : vector<8x1xf32> to vector<8x32xf32>
    %450 = arith.subf %431, %449 : vector<8x32xf32>
    %cst_177 = arith.constant 9.99999974E-5 : f32
    %451 = vector.broadcast %cst_177 : f32 to vector<8x1xf32>
    %452 = arith.addf %448, %451 : vector<8x1xf32>
    %453 = math.rsqrt %452 : vector<8x1xf32>
    %454 = vector.broadcast %453 : vector<8x1xf32> to vector<8x32xf32>
    %455 = arith.mulf %450, %454 : vector<8x32xf32>
    %456 = vector.broadcast %0 : vector<1x32xf32> to vector<8x32xf32>
    %457 = arith.mulf %455, %456 : vector<8x32xf32>
    %458 = vector.broadcast %1 : vector<1x32xf32> to vector<8x32xf32>
    %459 = arith.addf %457, %458 : vector<8x32xf32>
    %cst_178 = arith.constant dense<0.000000e+00> : vector<8x32xf32>
    %460 = tpu.matmul %459, %6, %cst_178 {dimension_numbers = #tpu.dot_dimension_numbers<[1], [0], [0], [1], [0, 0, 1, 1], [], []>} : vector<8x32xf32>, vector<32x32xf32>, vector<8x32xf32> -> vector<8x32xf32>
    %461 = vector.broadcast %2 : vector<1x32xf32> to vector<8x32xf32>
    %462 = arith.addf %460, %461 : vector<8x32xf32>
    %cst_179 = arith.constant 0.000000e+00 : f32
    %463 = vector.broadcast %cst_179 : f32 to vector<8x32xf32>
    %464 = arith.maximumf %462, %463 : vector<8x32xf32>
    %cst_180 = arith.constant dense<0.000000e+00> : vector<8x32xf32>
    %465 = tpu.matmul %464, %8, %cst_180 {dimension_numbers = #tpu.dot_dimension_numbers<[1], [0], [0], [1], [0, 0, 1, 1], [], []>} : vector<8x32xf32>, vector<32x32xf32>, vector<8x32xf32> -> vector<8x32xf32>
    %466 = vector.broadcast %3 : vector<1x32xf32> to vector<8x32xf32>
    %467 = arith.addf %465, %466 : vector<8x32xf32>
    %cst_181 = arith.constant 0.000000e+00 : f32
    %468 = vector.broadcast %cst_181 : f32 to vector<8x32xf32>
    %469 = arith.maximumf %467, %468 : vector<8x32xf32>
    %cst_182 = arith.constant dense<0.000000e+00> : vector<8x32xf32>
    %470 = tpu.matmul %469, %10, %cst_182 {dimension_numbers = #tpu.dot_dimension_numbers<[1], [0], [0], [1], [0, 0, 1, 1], [], []>} : vector<8x32xf32>, vector<32x32xf32>, vector<8x32xf32> -> vector<8x32xf32>
    %471 = vector.broadcast %4 : vector<1x32xf32> to vector<8x32xf32>
    %472 = arith.addf %470, %471 : vector<8x32xf32>
    %cst_183 = arith.constant dense<0.000000e+00> : vector<8x8xf32>
    %473 = tpu.matmul %472, %472, %cst_183 {dimension_numbers = #tpu.dot_dimension_numbers<[1], [1], [0], [0], [0, 0, 1, 0], [], []>} : vector<8x32xf32>, vector<8x32xf32>, vector<8x8xf32> -> vector<8x8xf32>
    %cst_184 = arith.constant 0.176776692 : f32
    %474 = vector.broadcast %cst_184 : f32 to vector<8x8xf32>
    %475 = arith.mulf %473, %474 : vector<8x8xf32>
    %476 = arith.negf %475 : vector<8x8xf32>
    %477 = math.exp %476 : vector<8x8xf32>
    %cst_185 = arith.constant 1.000000e+00 : f32
    %478 = vector.broadcast %cst_185 : f32 to vector<8x8xf32>
    %479 = arith.addf %478, %477 : vector<8x8xf32>
    %480 = arith.divf %478, %479 : vector<8x8xf32>
    %cst_186 = arith.constant 5.000000e-01 : f32
    %481 = vector.broadcast %cst_186 : f32 to vector<8x8xf32>
    %482 = arith.subf %480, %481 : vector<8x8xf32>
    %cst_187 = arith.constant 1.000000e+02 : f32
    %483 = vector.broadcast %cst_187 : f32 to vector<8x8xf32>
    %484 = arith.mulf %482, %483 : vector<8x8xf32>
    %485 = arith.negf %484 : vector<8x8xf32>
    %486 = math.exp %485 : vector<8x8xf32>
    %cst_188 = arith.constant 1.000000e+00 : f32
    %487 = vector.broadcast %cst_188 : f32 to vector<8x8xf32>
    %488 = arith.addf %487, %486 : vector<8x8xf32>
    %489 = arith.divf %487, %488 : vector<8x8xf32>
    %cst_189 = arith.constant 1.000000e+00 : f32
    %490 = vector.broadcast %cst_189 : f32 to vector<8x8xf32>
    %491 = arith.subf %490, %489 : vector<8x8xf32>
    %492 = tpu.concatenate %491, %491, %491, %491, %491, %491, %491, %491 in 1 : vector<8x8xf32>, vector<8x8xf32>, vector<8x8xf32>, vector<8x8xf32>, vector<8x8xf32>, vector<8x8xf32>, vector<8x8xf32>, vector<8x8xf32> -> vector<8x64xf32>
    %cst_190 = arith.constant dense<0.000000e+00> : vector<8xf32>
    %493 = vector.multi_reduction <add>, %437, %cst_190 [1] : vector<8x32xf32> to vector<8xf32>
    %494 = vector.shape_cast %493 : vector<8xf32> to vector<8x1xf32>
    %cst_191 = arith.constant 3.200000e+01 : f32
    %495 = vector.broadcast %cst_191 : f32 to vector<8x1xf32>
    %496 = arith.divf %494, %495 : vector<8x1xf32>
    %497 = vector.broadcast %496 : vector<8x1xf32> to vector<8x32xf32>
    %498 = arith.subf %437, %497 : vector<8x32xf32>
    %499 = arith.mulf %498, %498 : vector<8x32xf32>
    %cst_192 = arith.constant dense<0.000000e+00> : vector<8xf32>
    %500 = vector.multi_reduction <add>, %499, %cst_192 [1] : vector<8x32xf32> to vector<8xf32>
    %501 = vector.shape_cast %500 : vector<8xf32> to vector<8x1xf32>
    %cst_193 = arith.constant 3.200000e+01 : f32
    %502 = vector.broadcast %cst_193 : f32 to vector<8x1xf32>
    %503 = arith.divf %501, %502 : vector<8x1xf32>
    %504 = vector.broadcast %496 : vector<8x1xf32> to vector<8x32xf32>
    %505 = arith.subf %437, %504 : vector<8x32xf32>
    %cst_194 = arith.constant 9.99999974E-5 : f32
    %506 = vector.broadcast %cst_194 : f32 to vector<8x1xf32>
    %507 = arith.addf %503, %506 : vector<8x1xf32>
    %508 = math.rsqrt %507 : vector<8x1xf32>
    %509 = vector.broadcast %508 : vector<8x1xf32> to vector<8x32xf32>
    %510 = arith.mulf %505, %509 : vector<8x32xf32>
    %511 = vector.broadcast %0 : vector<1x32xf32> to vector<8x32xf32>
    %512 = arith.mulf %510, %511 : vector<8x32xf32>
    %513 = vector.broadcast %1 : vector<1x32xf32> to vector<8x32xf32>
    %514 = arith.addf %512, %513 : vector<8x32xf32>
    %cst_195 = arith.constant dense<0.000000e+00> : vector<8x32xf32>
    %515 = tpu.matmul %514, %6, %cst_195 {dimension_numbers = #tpu.dot_dimension_numbers<[1], [0], [0], [1], [0, 0, 1, 1], [], []>} : vector<8x32xf32>, vector<32x32xf32>, vector<8x32xf32> -> vector<8x32xf32>
    %516 = vector.broadcast %2 : vector<1x32xf32> to vector<8x32xf32>
    %517 = arith.addf %515, %516 : vector<8x32xf32>
    %cst_196 = arith.constant 0.000000e+00 : f32
    %518 = vector.broadcast %cst_196 : f32 to vector<8x32xf32>
    %519 = arith.maximumf %517, %518 : vector<8x32xf32>
    %cst_197 = arith.constant dense<0.000000e+00> : vector<8x32xf32>
    %520 = tpu.matmul %519, %8, %cst_197 {dimension_numbers = #tpu.dot_dimension_numbers<[1], [0], [0], [1], [0, 0, 1, 1], [], []>} : vector<8x32xf32>, vector<32x32xf32>, vector<8x32xf32> -> vector<8x32xf32>
    %521 = vector.broadcast %3 : vector<1x32xf32> to vector<8x32xf32>
    %522 = arith.addf %520, %521 : vector<8x32xf32>
    %cst_198 = arith.constant 0.000000e+00 : f32
    %523 = vector.broadcast %cst_198 : f32 to vector<8x32xf32>
    %524 = arith.maximumf %522, %523 : vector<8x32xf32>
    %cst_199 = arith.constant dense<0.000000e+00> : vector<8x32xf32>
    %525 = tpu.matmul %524, %10, %cst_199 {dimension_numbers = #tpu.dot_dimension_numbers<[1], [0], [0], [1], [0, 0, 1, 1], [], []>} : vector<8x32xf32>, vector<32x32xf32>, vector<8x32xf32> -> vector<8x32xf32>
    %526 = vector.broadcast %4 : vector<1x32xf32> to vector<8x32xf32>
    %527 = arith.addf %525, %526 : vector<8x32xf32>
    %cst_200 = arith.constant dense<0.000000e+00> : vector<8x8xf32>
    %528 = tpu.matmul %527, %527, %cst_200 {dimension_numbers = #tpu.dot_dimension_numbers<[1], [1], [0], [0], [0, 0, 1, 0], [], []>} : vector<8x32xf32>, vector<8x32xf32>, vector<8x8xf32> -> vector<8x8xf32>
    %cst_201 = arith.constant 0.176776692 : f32
    %529 = vector.broadcast %cst_201 : f32 to vector<8x8xf32>
    %530 = arith.mulf %528, %529 : vector<8x8xf32>
    %531 = arith.negf %530 : vector<8x8xf32>
    %532 = math.exp %531 : vector<8x8xf32>
    %cst_202 = arith.constant 1.000000e+00 : f32
    %533 = vector.broadcast %cst_202 : f32 to vector<8x8xf32>
    %534 = arith.addf %533, %532 : vector<8x8xf32>
    %535 = arith.divf %533, %534 : vector<8x8xf32>
    %cst_203 = arith.constant 5.000000e-01 : f32
    %536 = vector.broadcast %cst_203 : f32 to vector<8x8xf32>
    %537 = arith.subf %535, %536 : vector<8x8xf32>
    %cst_204 = arith.constant 1.000000e+02 : f32
    %538 = vector.broadcast %cst_204 : f32 to vector<8x8xf32>
    %539 = arith.mulf %537, %538 : vector<8x8xf32>
    %540 = arith.negf %539 : vector<8x8xf32>
    %541 = math.exp %540 : vector<8x8xf32>
    %cst_205 = arith.constant 1.000000e+00 : f32
    %542 = vector.broadcast %cst_205 : f32 to vector<8x8xf32>
    %543 = arith.addf %542, %541 : vector<8x8xf32>
    %544 = arith.divf %542, %543 : vector<8x8xf32>
    %cst_206 = arith.constant 1.000000e+00 : f32
    %545 = vector.broadcast %cst_206 : f32 to vector<8x8xf32>
    %546 = arith.subf %545, %544 : vector<8x8xf32>
    %547 = tpu.concatenate %546, %546, %546, %546, %546, %546, %546, %546 in 1 : vector<8x8xf32>, vector<8x8xf32>, vector<8x8xf32>, vector<8x8xf32>, vector<8x8xf32>, vector<8x8xf32>, vector<8x8xf32>, vector<8x8xf32> -> vector<8x64xf32>
    %548 = tpu.concatenate %492, %547 in 1 : vector<8x64xf32>, vector<8x64xf32> -> vector<8x128xf32>
    %c24 = arith.constant 24 : index
    %c0_207 = arith.constant 0 : index
    %549 = vector.load %arg5[%c24, %c0_207] : memref<32x128xf32, #tpu.memory_space<vmem>>, vector<8x128xf32>
    %cst_208 = arith.constant 1.000000e+00 : f32
    %550 = vector.broadcast %cst_208 : f32 to vector<8x128xf32>
    %551 = arith.subf %549, %550 : vector<8x128xf32>
    %cst_209 = arith.constant 1.000000e+02 : f32
    %552 = vector.broadcast %cst_209 : f32 to vector<8x128xf32>
    %553 = arith.mulf %551, %552 : vector<8x128xf32>
    %554 = arith.negf %553 : vector<8x128xf32>
    %555 = math.exp %554 : vector<8x128xf32>
    %cst_210 = arith.constant 1.000000e+00 : f32
    %556 = vector.broadcast %cst_210 : f32 to vector<8x128xf32>
    %557 = arith.addf %556, %555 : vector<8x128xf32>
    %558 = arith.divf %556, %557 : vector<8x128xf32>
    %cst_211 = arith.constant 1.000000e+00 : f32
    %559 = vector.broadcast %cst_211 : f32 to vector<8x128xf32>
    %560 = arith.subf %559, %558 : vector<8x128xf32>
    %561 = arith.mulf %548, %560 : vector<8x128xf32>
    %c24_212 = arith.constant 24 : index
    %c0_213 = arith.constant 0 : index
    %562 = vector.load %arg7[%c24_212, %c0_213] : memref<32x128xf32, #tpu.memory_space<vmem>>, vector<8x128xf32>
    tpu.vector_store %arg7[%c24_212, %c0_213], %561 {strides = array<i32>} : memref<32x128xf32, #tpu.memory_space<vmem>>, vector<8x128xf32>,
    %c0_214 = arith.constant 0 : index
    %c0_215 = arith.constant 0 : index
    %c0_216 = arith.constant 0 : index
    %563 = vector.load %arg6[%c0_214, %c0_215, %c0_216] : memref<2x8x32xf32, #tpu.memory_space<vmem>>, vector<1x8x32xf32>
    %564 = vector.shape_cast %563 : vector<1x8x32xf32> to vector<8x32xf32>
    %565 = vector.shape_cast %431 : vector<8x32xf32> to vector<1x8x32xf32>
    tpu.vector_store %arg6[%c0_214, %c0_215, %c0_216], %565 {strides = array<i32>} : memref<2x8x32xf32, #tpu.memory_space<vmem>>, vector<1x8x32xf32>,
    %c1_217 = arith.constant 1 : index
    %c0_218 = arith.constant 0 : index
    %c0_219 = arith.constant 0 : index
    %566 = vector.load %arg6[%c1_217, %c0_218, %c0_219] : memref<2x8x32xf32, #tpu.memory_space<vmem>>, vector<1x8x32xf32>
    %567 = vector.shape_cast %566 : vector<1x8x32xf32> to vector<8x32xf32>
    %568 = vector.shape_cast %437 : vector<8x32xf32> to vector<1x8x32xf32>
    tpu.vector_store %arg6[%c1_217, %c0_218, %c0_219], %568 {strides = array<i32>} : memref<2x8x32xf32, #tpu.memory_space<vmem>>, vector<1x8x32xf32>,
    return
  }
}

</mosaic_0001>

<llo_original>
// kernel: tpu_custom_call.1
$region0: #{tpu_custom_call.1}
  #allocation0 [shape = 'u32[]', space=smem, size = 0x4, offset = 0x4, fixed_abs, tag = 'smem constant byte address 0x4 - core index']
  #allocation1 [shape = 'u32[72,128]{1,0:T(1,128)}', space=vmem, size = 0x9000, scoped, tag = 'internal scratch']
  %s0 = inlined_call_operand.hbm [shape: f32[2,8,32], index: 0, kind: input, shape index: {}]
  %s1 = inlined_call_operand.hbm [shape: f32[3,32,32], index: 1, kind: input, shape index: {}]
  %s2 = inlined_call_operand.hbm [shape: f32[8,32], index: 2, kind: input, shape index: {}]
  %s3 = inlined_call_operand.hbm [shape: f32[3,32,32], index: 3, kind: input, shape index: {}]
  %s4 = inlined_call_operand.vmem [shape: f32[3,1,32], index: 4, kind: input, shape index: {}]
  %s5 = inlined_call_operand.hbm [shape: f32[32,128], index: 5, kind: input, shape index: {}]
  %s6 = inlined_call_operand.hbm [shape: f32[2,8,32], index: 6, kind: output, shape index: {0}]
  %s7 = inlined_call_operand.hbm [shape: f32[32,128], index: 7, kind: output, shape index: {1}]
  %8 = xla_tuple %s6, %s7
  %s9 = sld [smem:[#allocation0]]
  $region62: #{tpu_custom_call.1} parent=0
    _
  %s11 = ssub.s32 1, %s9
  %s12 = scalar_select 0, %s11, %s9
  $region1: #{tpu_custom_call.1} parent=0
    #allocation2 [shape = 'u8[8192]{0}', space=vmem, size = 0x2000, scoped, tag = 'input window, operand 0, single buffered']
    #allocation3 [shape = 's32[1]{0}', space=sflag, size = 0x4, scoped, tag = 'scoped memory for tpu_custom_call.1']
    #allocation4 [shape = 's32[1]{0}', space=sflag, size = 0x4, scoped, tag = 'scoped memory for tpu_custom_call.1']
    #allocation5 [shape = 'u8[49152]{0}', space=vmem, size = 0xc000, scoped, tag = 'input window, operand 1, single buffered']
    #allocation6 [shape = 's32[1]{0}', space=sflag, size = 0x4, scoped, tag = 'scoped memory for tpu_custom_call.1']
    #allocation7 [shape = 'u8[4096]{0}', space=vmem, size = 0x1000, scoped, tag = 'input window, operand 2, single buffered']
    #allocation8 [shape = 'u8[49152]{0}', space=vmem, size = 0xc000, scoped, tag = 'input window, operand 3, single buffered']
    #allocation9 [shape = 's32[1]{0}', space=sflag, size = 0x4, scoped, tag = 'scoped memory for tpu_custom_call.1']
    #allocation10 [shape = 'u8[16384]{0}', space=vmem, size = 0x4000, scoped, tag = 'input window, operand 5, single buffered']
    #allocation11 [shape = 'u8[8192]{0}', space=vmem, size = 0x2000, scoped, tag = 'output window, operand 0, single buffered']
    #allocation12 [shape = 'u8[16384]{0}', space=vmem, size = 0x4000, scoped, tag = 'output window, operand 1, single buffered']
    #allocation13 [shape = 's32[1]{0}', space=sflag, size = 0x4, scoped, tag = 'scoped memory for tpu_custom_call.1']
    %13 = vsyncpa [#allocation3], 0
    %14 = vsyncpa [#allocation6], 0
    %15 = vsyncpa [#allocation9], 0
    %16 = vsyncpa [#allocation4], 0
    %17 = vsyncpa [#allocation13], 0
    // Predicated region
    $region2: #{tpu_custom_call.1} parent=1 // pred_check
      _
    $region3: #{tpu_custom_call.1} parent=1 // pred_check_branch
      %19 = sbr.rel (0) target = $region5
    $region4: #{tpu_custom_call.1} parent=1 // pred_region
      %21 = vsyncadd [#allocation3], 0
      %s22 = sshll.u32 %s0, 4
      %s23 = int_to_ptr.hbm [resolvable:$true] %s22
      %s24 = sshll.u32 [#allocation2], 4
      %s25 = int_to_ptr.vmem [resolvable:$true] %s24
      %30 = dma.hbm_to_vmem [thread:$0]  %s23, 256, %s25, [#allocation3], 128, 128, 8
    $region5: #{tpu_custom_call.1} parent=1 // pred_fallthru
      _
    // Predicated region
    $region6: #{tpu_custom_call.1} parent=1 // pred_check
      _
    $region7: #{tpu_custom_call.1} parent=1 // pred_check_branch
      %32 = sbr.rel (0) target = $region9
    $region8: #{tpu_custom_call.1} parent=1 // pred_region
      %34 = vsyncadd [#allocation6], 0
      %s35 = sshll.u32 %s1, 4
      %s36 = int_to_ptr.hbm [resolvable:$true] %s35
      %s37 = sshll.u32 [#allocation5], 4
      %s38 = int_to_ptr.vmem [resolvable:$true] %s37
      %43 = dma.hbm_to_vmem [thread:$0]  %s36, 1536, %s38, [#allocation6], 128, 128, 8
    $region9: #{tpu_custom_call.1} parent=1 // pred_fallthru
      _
    // Predicated region
    $region10: #{tpu_custom_call.1} parent=1 // pred_check
      _
    $region11: #{tpu_custom_call.1} parent=1 // pred_check_branch
      %45 = sbr.rel (0) target = $region13
    $region12: #{tpu_custom_call.1} parent=1 // pred_region
      %47 = vsyncadd [#allocation6], 0
      %s49 = sshll.u32 %s2, 4
      %s50 = int_to_ptr.hbm [resolvable:$true] %s49
      %s51 = sshll.u32 [#allocation7], 4
      %s52 = int_to_ptr.vmem [resolvable:$true] %s51
      %54 = dma.hbm_to_vmem [thread:$0]  %s50, 128, %s52, [#allocation6]
    $region13: #{tpu_custom_call.1} parent=1 // pred_fallthru
      _
    // Predicated region
    $region14: #{tpu_custom_call.1} parent=1 // pred_check
      _
    $region15: #{tpu_custom_call.1} parent=1 // pred_check_branch
      %56 = sbr.rel (0) target = $region17
    $region16: #{tpu_custom_call.1} parent=1 // pred_region
      %58 = vsyncadd [#allocation9], 0
      %s59 = sshll.u32 %s3, 4
      %s60 = int_to_ptr.hbm [resolvable:$true] %s59
      %s61 = sshll.u32 [#allocation8], 4
      %s62 = int_to_ptr.vmem [resolvable:$true] %s61
      %67 = dma.hbm_to_vmem [thread:$0]  %s60, 1536, %s62, [#allocation9], 128, 128, 8
    $region17: #{tpu_custom_call.1} parent=1 // pred_fallthru
      _
    // Predicated region
    $region18: #{tpu_custom_call.1} parent=1 // pred_check
      _
    $region19: #{tpu_custom_call.1} parent=1 // pred_check_branch
      %69 = sbr.rel (0) target = $region21
    $region20: #{tpu_custom_call.1} parent=1 // pred_region
      _
    $region21: #{tpu_custom_call.1} parent=1 // pred_fallthru
      _
    // Predicated region
    $region22: #{tpu_custom_call.1} parent=1 // pred_check
      _
    $region23: #{tpu_custom_call.1} parent=1 // pred_check_branch
      %71 = sbr.rel (0) target = $region25
    $region24: #{tpu_custom_call.1} parent=1 // pred_region
      %73 = vsyncadd [#allocation9], 0
      %s74 = sshll.u32 %s5, 4
      %s75 = int_to_ptr.hbm [resolvable:$true] %s74
      %s76 = sshll.u32 [#allocation10], 4
      %s77 = int_to_ptr.vmem [resolvable:$true] %s76
      %82 = dma.hbm_to_vmem [thread:$0]  %s75, 512, %s77, [#allocation9], 128, 128, 8
    $region25: #{tpu_custom_call.1} parent=1 // pred_fallthru
      _
    // Predicated region
    $region26: #{tpu_custom_call.1} parent=1 // pred_check
      _
    $region27: #{tpu_custom_call.1} parent=1 // pred_check_branch
      %84 = sbr.rel (0) target = $region29
    $region28: #{tpu_custom_call.1} parent=1 // pred_region
      %86 = dma.done [#allocation3], 256
    $region29: #{tpu_custom_call.1} parent=1 // pred_fallthru
      _
    // Predicated region
    $region30: #{tpu_custom_call.1} parent=1 // pred_check
      _
    $region31: #{tpu_custom_call.1} parent=1 // pred_check_branch
      %88 = sbr.rel (0) target = $region33
    $region32: #{tpu_custom_call.1} parent=1 // pred_region
      %90 = dma.done [#allocation6], 1536
    $region33: #{tpu_custom_call.1} parent=1 // pred_fallthru
      _
    // Predicated region
    $region34: #{tpu_custom_call.1} parent=1 // pred_check
      _
    $region35: #{tpu_custom_call.1} parent=1 // pred_check_branch
      %92 = sbr.rel (0) target = $region37
    $region36: #{tpu_custom_call.1} parent=1 // pred_region
      %94 = dma.done [#allocation6], 128
    $region37: #{tpu_custom_call.1} parent=1 // pred_fallthru
      _
    // Predicated region
    $region38: #{tpu_custom_call.1} parent=1 // pred_check
      _
    $region39: #{tpu_custom_call.1} parent=1 // pred_check_branch
      %96 = sbr.rel (0) target = $region41
    $region40: #{tpu_custom_call.1} parent=1 // pred_region
      %98 = dma.done [#allocation9], 1536
    $region41: #{tpu_custom_call.1} parent=1 // pred_fallthru
      _
    // Predicated region
    $region42: #{tpu_custom_call.1} parent=1 // pred_check
      _
    $region43: #{tpu_custom_call.1} parent=1 // pred_check_branch
      %100 = sbr.rel (0) target = $region45
    $region44: #{tpu_custom_call.1} parent=1 // pred_region
      %102 = dma.done [#allocation9], 512
    $region45: #{tpu_custom_call.1} parent=1 // pred_fallthru
      _
    %v103 = vld [vmem:[#allocation7] sm:$0x1]
    %v104 = vld [vmem:[#allocation7 + $0x1] sm:$0x1]
    %v105 = vld [vmem:[#allocation7 + $0x2] sm:$0x1]
    %v106 = vld [vmem:[#allocation7 + $0x3] sm:$0x1]
    %v107 = vld [vmem:[#allocation7 + $0x4] sm:$0x1]
    %v108 = vld [vmem:[#allocation5] sm:$0xff]
    %v109 = vld [vmem:[#allocation5 + $0x8] sm:$0xff]
    %v110 = vld [vmem:[#allocation5 + $0x10] sm:$0xff]
    %v111 = vld [vmem:[#allocation5 + $0x18] sm:$0xff]
    %s112 = scalar_lea.vmem [#allocation5], 32
    %v113 = vld [vmem:[%s112] sm:$0xff]
    %v114 = vld [vmem:[%s112 + $0x8] sm:$0xff]
    %v115 = vld [vmem:[%s112 + $0x10] sm:$0xff]
    %v116 = vld [vmem:[%s112 + $0x18] sm:$0xff]
    %s117 = scalar_lea.vmem [#allocation5], 64
    %v118 = vld [vmem:[%s117] sm:$0xff]
    %v119 = vld [vmem:[%s117 + $0x8] sm:$0xff]
    %v120 = vld [vmem:[%s117 + $0x10] sm:$0xff]
    %v121 = vld [vmem:[%s117 + $0x18] sm:$0xff]
    %v122 = vld [vmem:[#allocation2] sm:$0xff]
    %s123 = scalar_lea.vmem [#allocation2], 8
    %v124 = vld [vmem:[%s123] sm:$0xff]
    %vm125 = vcmask 261120
    %v126 = vsel %vm125, %v122, 0.0
    %127 = vadd.xlane.f32.xlu0 %v126
    %v128 = vpop.xlane.xlu0 %127
    %v129 = vrcp.pop 32.0
    %v130 = vmul.f32 32.0, %v129
    %v131 = vsub.f32 1.0, %v130
    %v132 = vmul.f32 %v129, %v131
    %v133 = vadd.f32 %v129, %v132
    %vm134 = vweird.f32 %v129
    %v135 = vsel %vm134, %v129, %v133
    %v136 = vmul.f32 %v128, %v135
    %v137 = vsub.f32 %v122, %v136
    %v138 = vmul.f32 %v137, %v137
    %v139 = vsel %vm125, %v138, 0.0
    %140 = vadd.xlane.f32.xlu0 %v139
    %v141 = vpop.xlane.xlu0 %140
    %v142 = vmul.f32 %v141, %v135
    %v143 = vadd.f32 %v142, 0.0001
    %v144 = vrsqrt.pop %v143
    %v145 = vmul.f32 %v144, %v143
    %v146 = vmul.f32 %v145, %v144
    %v147 = vmul.f32 0.5, %v146
    %v148 = vsub.f32 1.5, %v147
    %v149 = vmul.f32 %v144, %v148
    %vm150 = vweird.f32 %v143
    %vm151 = vweird.f32 %v144
    %vm152 = vmor %vm150, %vm151
    %v153 = vsel %vm152, %v144, %v149
    %v154 = vmul.f32 %v137, %v153
    %v155 = vperm.slane %v103, 0
    %v156 = vmul.f32 %v154, %v155
    %v157 = vperm.slane %v104, 0
    %v158 = vadd.f32 %v156, %v157
    %v159 = vperm.slane %v105, 0
    %v161 = vsel %vm125, %v158, 0
    %163 = vmatpush.msra.mxu0 0.0
    %164 = vmatpush.msra.mxu0 0.0
    %165 = vmatpush.msra.mxu0 0.0
    %166 = vmatpush.msra.mxu0 0.0
    %167 = vmatpush.msra.mxu0 0.0
    %168 = vmatpush.msra.mxu0 0.0
    %169 = vmatpush.msra.mxu0 0.0
    %170 = vmatpush.msra.mxu0 0.0
    %171 = vmatpush.msra.mxu0 0.0
    %172 = vmatpush.msra.mxu0 0.0
    %173 = vmatpush.msra.mxu0 0.0
    %174 = vmatpush.msra.mxu0 0.0
    %175 = vmatpush.msra.mxu0 %v111
    %176 = vmatpush.msra.mxu0 %v110
    %177 = vmatpush.msra.mxu0 %v109
    %178 = vmatpush.msra.mxu0 %v108
    %179 = vmatmul.f32.gmra.mxu0 %v161
    %v180 = vpop.f32.mrf.mxu0
    %v181 = vadd.f32 %v159, %v180
    %182 = vdwg.mxu0
    %v183 = vmax.f32 %v181, 0.0
    %v184 = vperm.slane %v106, 0
    %v186 = vsel %vm125, %v183, 0
    %188 = vmatpush.msra.mxu0 0.0
    %189 = vmatpush.msra.mxu0 0.0
    %190 = vmatpush.msra.mxu0 0.0
    %191 = vmatpush.msra.mxu0 0.0
    %192 = vmatpush.msra.mxu0 0.0
    %193 = vmatpush.msra.mxu0 0.0
    %194 = vmatpush.msra.mxu0 0.0
    %195 = vmatpush.msra.mxu0 0.0
    %196 = vmatpush.msra.mxu0 0.0
    %197 = vmatpush.msra.mxu0 0.0
    %198 = vmatpush.msra.mxu0 0.0
    %199 = vmatpush.msra.mxu0 0.0
    %200 = vmatpush.msra.mxu0 %v116
    %201 = vmatpush.msra.mxu0 %v115
    %202 = vmatpush.msra.mxu0 %v114
    %203 = vmatpush.msra.mxu0 %v113
    %204 = vmatmul.f32.gmra.mxu0 %v186
    %v205 = vpop.f32.mrf.mxu0
    %v206 = vadd.f32 %v184, %v205
    %207 = vdwg.mxu0
    %v208 = vmax.f32 %v206, 0.0
    %v209 = vperm.slane %v107, 0
    %v211 = vsel %vm125, %v208, 0
    %213 = vmatpush.msra.mxu0 0.0
    %214 = vmatpush.msra.mxu0 0.0
    %215 = vmatpush.msra.mxu0 0.0
    %216 = vmatpush.msra.mxu0 0.0
    %217 = vmatpush.msra.mxu0 0.0
    %218 = vmatpush.msra.mxu0 0.0
    %219 = vmatpush.msra.mxu0 0.0
    %220 = vmatpush.msra.mxu0 0.0
    %221 = vmatpush.msra.mxu0 0.0
    %222 = vmatpush.msra.mxu0 0.0
    %223 = vmatpush.msra.mxu0 0.0
    %224 = vmatpush.msra.mxu0 0.0
    %225 = vmatpush.msra.mxu0 %v121
    %226 = vmatpush.msra.mxu0 %v120
    %227 = vmatpush.msra.mxu0 %v119
    %228 = vmatpush.msra.mxu0 %v118
    %229 = vmatmul.f32.gmra.mxu0 %v211
    %v230 = vpop.f32.mrf.mxu0
    %v231 = vadd.f32 %v209, %v230
    %232 = vdwg.mxu0
    %v234 = vsel %vm125, %v231, 0
    %236 = vmatpush.xpose.msra.mxu0 0.0
    %237 = vmatpush.xpose.msra.mxu0 0.0
    %238 = vmatpush.xpose.msra.mxu0 0.0
    %239 = vmatpush.xpose.msra.mxu0 0.0
    %240 = vmatpush.xpose.msra.mxu0 0.0
    %241 = vmatpush.xpose.msra.mxu0 0.0
    %242 = vmatpush.xpose.msra.mxu0 0.0
    %243 = vmatpush.xpose.msra.mxu0 0.0
    %244 = vmatpush.xpose.msra.mxu0 0.0
    %245 = vmatpush.xpose.msra.mxu0 0.0
    %246 = vmatpush.xpose.msra.mxu0 0.0
    %247 = vmatpush.xpose.msra.mxu0 0.0
    %248 = vmatpush.xpose.msra.mxu0 0.0
    %249 = vmatpush.xpose.msra.mxu0 0.0
    %250 = vmatpush.xpose.msra.mxu0 0.0
    %251 = vmatpush.xpose.msra.mxu0 %v234
    %252 = vmatmul.f32.gmra.mxu0 %v234
    %v253 = vpop.f32.mrf.mxu0
    %v254 = vadd.f32 0.0, %v253
    %255 = vdwg.mxu0
    %v256 = vmul.f32 %v254, 0.17677669
    %v257 = vxor.u32 %v256, 2147483648
    %v258 = vmul.f32 %v257, 1.442695
    %v259 = vpow.pop %v258
    %v260 = vadd.f32 %v259, 1.0
    %v261 = vrcp.pop %v260
    %v262 = vmul.f32 %v260, %v261
    %v263 = vsub.f32 1.0, %v262
    %v264 = vmul.f32 %v261, %v263
    %v265 = vadd.f32 %v261, %v264
    %vm266 = vweird.f32 %v260
    %vm267 = vweird.f32 %v261
    %vm268 = vmor %vm266, %vm267
    %v269 = vsel %vm268, %v261, %v265
    %v270 = vand.u32 2147483647, %v260
    %vm271 = vcmp.eq.f32.partialorder %v270, 8.507059e+37
    %v272 = vand.u32 %v260, 2147483648
    %v273 = vor.u32 1.1754944e-38, %v272
    %v274 = vsel %vm271, %v273, %v269
    %v275 = vmul.f32 1.0, %v274
    %v276 = vsub.f32 %v275, 0.5
    %v277 = vmul.f32 %v276, 100.0
    %v278 = vxor.u32 %v277, 2147483648
    %v279 = vmul.f32 %v278, 1.442695
    %v280 = vpow.pop %v279
    %v281 = vadd.f32 %v280, 1.0
    %v282 = vrcp.pop %v281
    %v283 = vmul.f32 %v281, %v282
    %v284 = vsub.f32 1.0, %v283
    %v285 = vmul.f32 %v282, %v284
    %v286 = vadd.f32 %v282, %v285
    %vm287 = vweird.f32 %v281
    %vm288 = vweird.f32 %v282
    %vm289 = vmor %vm287, %vm288
    %v290 = vsel %vm289, %v282, %v286
    %v291 = vand.u32 2147483647, %v281
    %vm292 = vcmp.eq.f32.partialorder %v291, 8.507059e+37
    %v293 = vand.u32 %v281, 2147483648
    %v294 = vor.u32 1.1754944e-38, %v293
    %v295 = vsel %vm292, %v294, %v290
    %v296 = vmul.f32 1.0, %v295
    %v297 = vsub.f32 1.0, %v296
    %299 = vrot.lane.b32.xlu0 %v297, 8
    %v300 = vpop.permute.xlu0 %299
    %302 = vrot.lane.b32.xlu0 %v297, 16
    %v303 = vpop.permute.xlu0 %302
    %305 = vrot.lane.b32.xlu0 %v297, 24
    %v306 = vpop.permute.xlu0 %305
    %308 = vrot.lane.b32.xlu0 %v297, 32
    %v309 = vpop.permute.xlu0 %308
    %311 = vrot.lane.b32.xlu0 %v297, 40
    %v312 = vpop.permute.xlu0 %311
    %314 = vrot.lane.b32.xlu0 %v297, 48
    %v315 = vpop.permute.xlu0 %314
    %317 = vrot.lane.b32.xlu0 %v297, 56
    %v318 = vpop.permute.xlu0 %317
    %vm320 = vcmask 64512
    %v321 = vsel %vm320, %v297, %v300
    %vm322 = vcmask 130048
    %v323 = vsel %vm322, %v321, %v303
    %vm324 = vcmask 195584
    %v325 = vsel %vm324, %v323, %v306
    %v326 = vsel %vm125, %v325, %v309
    %vm327 = vcmask 326656
    %v328 = vsel %vm327, %v326, %v312
    %vm329 = vcmask 392192
    %v330 = vsel %vm329, %v328, %v315
    %vm331 = vcmask 457728
    %v332 = vsel %vm331, %v330, %v318
    %v333 = vsel %vm125, %v124, 0.0
    %334 = vadd.xlane.f32.xlu0 %v333
    %v335 = vpop.xlane.xlu0 %334
    %v336 = vmul.f32 %v335, %v135
    %v337 = vsub.f32 %v124, %v336
    %v338 = vmul.f32 %v337, %v337
    %v339 = vsel %vm125, %v338, 0.0
    %340 = vadd.xlane.f32.xlu0 %v339
    %v341 = vpop.xlane.xlu0 %340
    %v342 = vmul.f32 %v341, %v135
    %v343 = vadd.f32 %v342, 0.0001
    %v344 = vrsqrt.pop %v343
    %v345 = vmul.f32 %v344, %v343
    %v346 = vmul.f32 %v345, %v344
    %v347 = vmul.f32 0.5, %v346
    %v348 = vsub.f32 1.5, %v347
    %v349 = vmul.f32 %v344, %v348
    %vm350 = vweird.f32 %v343
    %vm351 = vweird.f32 %v344
    %vm352 = vmor %vm350, %vm351
    %v353 = vsel %vm352, %v344, %v349
    %v354 = vmul.f32 %v337, %v353
    %v355 = vmul.f32 %v354, %v155
    %v356 = vadd.f32 %v355, %v157
    %v358 = vsel %vm125, %v356, 0
    %360 = vmatpush.msra.mxu0 0.0
    %361 = vmatpush.msra.mxu0 0.0
    %362 = vmatpush.msra.mxu0 0.0
    %363 = vmatpush.msra.mxu0 0.0
    %364 = vmatpush.msra.mxu0 0.0
    %365 = vmatpush.msra.mxu0 0.0
    %366 = vmatpush.msra.mxu0 0.0
    %367 = vmatpush.msra.mxu0 0.0
    %368 = vmatpush.msra.mxu0 0.0
    %369 = vmatpush.msra.mxu0 0.0
    %370 = vmatpush.msra.mxu0 0.0
    %371 = vmatpush.msra.mxu0 0.0
    %372 = vmatpush.msra.mxu0 %v111
    %373 = vmatpush.msra.mxu0 %v110
    %374 = vmatpush.msra.mxu0 %v109
    %375 = vmatpush.msra.mxu0 %v108
    %376 = vmatmul.f32.gmra.mxu0 %v358
    %v377 = vpop.f32.mrf.mxu0
    %v378 = vadd.f32 %v159, %v377
    %379 = vdwg.mxu0
    %v380 = vmax.f32 %v378, 0.0
    %v382 = vsel %vm125, %v380, 0
    %384 = vmatpush.msra.mxu0 0.0
    %385 = vmatpush.msra.mxu0 0.0
    %386 = vmatpush.msra.mxu0 0.0
    %387 = vmatpush.msra.mxu0 0.0
    %388 = vmatpush.msra.mxu0 0.0
    %389 = vmatpush.msra.mxu0 0.0
    %390 = vmatpush.msra.mxu0 0.0
    %391 = vmatpush.msra.mxu0 0.0
    %392 = vmatpush.msra.mxu0 0.0
    %393 = vmatpush.msra.mxu0 0.0
    %394 = vmatpush.msra.mxu0 0.0
    %395 = vmatpush.msra.mxu0 0.0
    %396 = vmatpush.msra.mxu0 %v116
    %397 = vmatpush.msra.mxu0 %v115
    %398 = vmatpush.msra.mxu0 %v114
    %399 = vmatpush.msra.mxu0 %v113
    %400 = vmatmul.f32.gmra.mxu0 %v382
    %v401 = vpop.f32.mrf.mxu0
    %v402 = vadd.f32 %v184, %v401
    %403 = vdwg.mxu0
    %v404 = vmax.f32 %v402, 0.0
    %v406 = vsel %vm125, %v404, 0
    %408 = vmatpush.msra.mxu0 0.0
    %409 = vmatpush.msra.mxu0 0.0
    %410 = vmatpush.msra.mxu0 0.0
    %411 = vmatpush.msra.mxu0 0.0
    %412 = vmatpush.msra.mxu0 0.0
    %413 = vmatpush.msra.mxu0 0.0
    %414 = vmatpush.msra.mxu0 0.0
    %415 = vmatpush.msra.mxu0 0.0
    %416 = vmatpush.msra.mxu0 0.0
    %417 = vmatpush.msra.mxu0 0.0
    %418 = vmatpush.msra.mxu0 0.0
    %419 = vmatpush.msra.mxu0 0.0
    %420 = vmatpush.msra.mxu0 %v121
    %421 = vmatpush.msra.mxu0 %v120
    %422 = vmatpush.msra.mxu0 %v119
    %423 = vmatpush.msra.mxu0 %v118
    %424 = vmatmul.f32.gmra.mxu0 %v406
    %v425 = vpop.f32.mrf.mxu0
    %v426 = vadd.f32 %v209, %v425
    %427 = vdwg.mxu0
    %v429 = vsel %vm125, %v426, 0
    %431 = vmatpush.xpose.msra.mxu0 0.0
    %432 = vmatpush.xpose.msra.mxu0 0.0
    %433 = vmatpush.xpose.msra.mxu0 0.0
    %434 = vmatpush.xpose.msra.mxu0 0.0
    %435 = vmatpush.xpose.msra.mxu0 0.0
    %436 = vmatpush.xpose.msra.mxu0 0.0
    %437 = vmatpush.xpose.msra.mxu0 0.0
    %438 = vmatpush.xpose.msra.mxu0 0.0
    %439 = vmatpush.xpose.msra.mxu0 0.0
    %440 = vmatpush.xpose.msra.mxu0 0.0
    %441 = vmatpush.xpose.msra.mxu0 0.0
    %442 = vmatpush.xpose.msra.mxu0 0.0
    %443 = vmatpush.xpose.msra.mxu0 0.0
    %444 = vmatpush.xpose.msra.mxu0 0.0
    %445 = vmatpush.xpose.msra.mxu0 0.0
    %446 = vmatpush.xpose.msra.mxu0 %v429
    %447 = vmatmul.f32.gmra.mxu0 %v429
    %v448 = vpop.f32.mrf.mxu0
    %v449 = vadd.f32 0.0, %v448
    %450 = vdwg.mxu0
    %v451 = vmul.f32 %v449, 0.17677669
    %v452 = vxor.u32 %v451, 2147483648
    %v453 = vmul.f32 %v452, 1.442695
    %v454 = vpow.pop %v453
    %v455 = vadd.f32 %v454, 1.0
    %v456 = vrcp.pop %v455
    %v457 = vmul.f32 %v455, %v456
    %v458 = vsub.f32 1.0, %v457
    %v459 = vmul.f32 %v456, %v458
    %v460 = vadd.f32 %v456, %v459
    %vm461 = vweird.f32 %v455
    %vm462 = vweird.f32 %v456
    %vm463 = vmor %vm461, %vm462
    %v464 = vsel %vm463, %v456, %v460
    %v465 = vand.u32 2147483647, %v455
    %vm466 = vcmp.eq.f32.partialorder %v465, 8.507059e+37
    %v467 = vand.u32 %v455, 2147483648
    %v468 = vor.u32 1.1754944e-38, %v467
    %v469 = vsel %vm466, %v468, %v464
    %v470 = vmul.f32 1.0, %v469
    %v471 = vsub.f32 %v470, 0.5
    %v472 = vmul.f32 %v471, 100.0
    %v473 = vxor.u32 %v472, 2147483648
    %v474 = vmul.f32 %v473, 1.442695
    %v475 = vpow.pop %v474
    %v476 = vadd.f32 %v475, 1.0
    %v477 = vrcp.pop %v476
    %v478 = vmul.f32 %v476, %v477
    %v479 = vsub.f32 1.0, %v478
    %v480 = vmul.f32 %v477, %v479
    %v481 = vadd.f32 %v477, %v480
    %vm482 = vweird.f32 %v476
    %vm483 = vweird.f32 %v477
    %vm484 = vmor %vm482, %vm483
    %v485 = vsel %vm484, %v477, %v481
    %v486 = vand.u32 2147483647, %v476
    %vm487 = vcmp.eq.f32.partialorder %v486, 8.507059e+37
    %v488 = vand.u32 %v476, 2147483648
    %v489 = vor.u32 1.1754944e-38, %v488
    %v490 = vsel %vm487, %v489, %v485
    %v491 = vmul.f32 1.0, %v490
    %v492 = vsub.f32 1.0, %v491
    %494 = vrot.lane.b32.xlu0 %v492, 8
    %v495 = vpop.permute.xlu0 %494
    %497 = vrot.lane.b32.xlu0 %v492, 16
    %v498 = vpop.permute.xlu0 %497
    %500 = vrot.lane.b32.xlu0 %v492, 24
    %v501 = vpop.permute.xlu0 %500
    %503 = vrot.lane.b32.xlu0 %v492, 32
    %v504 = vpop.permute.xlu0 %503
    %506 = vrot.lane.b32.xlu0 %v492, 40
    %v507 = vpop.permute.xlu0 %506
    %509 = vrot.lane.b32.xlu0 %v492, 48
    %v510 = vpop.permute.xlu0 %509
    %512 = vrot.lane.b32.xlu0 %v492, 56
    %v513 = vpop.permute.xlu0 %512
    %v515 = vsel %vm320, %v492, %v495
    %v516 = vsel %vm322, %v515, %v498
    %v517 = vsel %vm324, %v516, %v501
    %v518 = vsel %vm125, %v517, %v504
    %v519 = vsel %vm327, %v518, %v507
    %v520 = vsel %vm329, %v519, %v510
    %v521 = vsel %vm331, %v520, %v513
    %523 = vrot.lane.b32.xlu0 %v521, 64
    %v524 = vpop.permute.xlu0 %523
    %vm526 = vcmask 523264
    %v527 = vsel %vm526, %v332, %v524
    %v528 = vld [vmem:[#allocation10] sm:$0xff]
    %v529 = vsub.f32 %v528, 1.0
    %v530 = vmul.f32 %v529, 100.0
    %v531 = vxor.u32 %v530, 2147483648
    %v532 = vmul.f32 %v531, 1.442695
    %v533 = vpow.pop %v532
    %v534 = vadd.f32 %v533, 1.0
    %v535 = vrcp.pop %v534
    %v536 = vmul.f32 %v534, %v535
    %v537 = vsub.f32 1.0, %v536
    %v538 = vmul.f32 %v535, %v537
    %v539 = vadd.f32 %v535, %v538
    %vm540 = vweird.f32 %v534
    %vm541 = vweird.f32 %v535
    %vm542 = vmor %vm540, %vm541
    %v543 = vsel %vm542, %v535, %v539
    %v544 = vand.u32 2147483647, %v534
    %vm545 = vcmp.eq.f32.partialorder %v544, 8.507059e+37
    %v546 = vand.u32 %v534, 2147483648
    %v547 = vor.u32 1.1754944e-38, %v546
    %v548 = vsel %vm545, %v547, %v543
    %v549 = vmul.f32 1.0, %v548
    %v550 = vsub.f32 1.0, %v549
    %v551 = vmul.f32 %v527, %v550
    %552 = vst [vmem:[#allocation12] sm:$0xff] %v551
    %v553 = vld [vmem:[#allocation8] sm:$0xff]
    %v554 = vld [vmem:[#allocation8 + $0x8] sm:$0xff]
    %v555 = vld [vmem:[#allocation8 + $0x10] sm:$0xff]
    %v556 = vld [vmem:[#allocation8 + $0x18] sm:$0xff]
    %v557 = vld [vmem:[%s4] sm:$0x1]
    %v559 = vperm.slane %v557, 0
    %v562 = vsel %vm125, %v122, 0
    %564 = vmatpush.msra.mxu0 0.0
    %565 = vmatpush.msra.mxu0 0.0
    %566 = vmatpush.msra.mxu0 0.0
    %567 = vmatpush.msra.mxu0 0.0
    %568 = vmatpush.msra.mxu0 0.0
    %569 = vmatpush.msra.mxu0 0.0
    %570 = vmatpush.msra.mxu0 0.0
    %571 = vmatpush.msra.mxu0 0.0
    %572 = vmatpush.msra.mxu0 0.0
    %573 = vmatpush.msra.mxu0 0.0
    %574 = vmatpush.msra.mxu0 0.0
    %575 = vmatpush.msra.mxu0 0.0
    %576 = vmatpush.msra.mxu0 %v556
    %577 = vmatpush.msra.mxu0 %v555
    %578 = vmatpush.msra.mxu0 %v554
    %579 = vmatpush.msra.mxu0 %v553
    %580 = vmatmul.f32.gmra.mxu0 %v562
    %v581 = vpop.f32.mrf.mxu0
    %v582 = vadd.f32 %v559, %v581
    %583 = vdwg.mxu0
    %v584 = vmax.f32 %v582, 0.0
    %v585 = vadd.f32 %v122, %v584
    %v587 = vsel %vm125, %v124, 0
    %589 = vmatpush.msra.mxu0 0.0
    %590 = vmatpush.msra.mxu0 0.0
    %591 = vmatpush.msra.mxu0 0.0
    %592 = vmatpush.msra.mxu0 0.0
    %593 = vmatpush.msra.mxu0 0.0
    %594 = vmatpush.msra.mxu0 0.0
    %595 = vmatpush.msra.mxu0 0.0
    %596 = vmatpush.msra.mxu0 0.0
    %597 = vmatpush.msra.mxu0 0.0
    %598 = vmatpush.msra.mxu0 0.0
    %599 = vmatpush.msra.mxu0 0.0
    %600 = vmatpush.msra.mxu0 0.0
    %601 = vmatpush.msra.mxu0 %v556
    %602 = vmatpush.msra.mxu0 %v555
    %603 = vmatpush.msra.mxu0 %v554
    %604 = vmatpush.msra.mxu0 %v553
    %605 = vmatmul.f32.gmra.mxu0 %v587
    %v606 = vpop.f32.mrf.mxu0
    %v607 = vadd.f32 %v559, %v606
    %608 = vdwg.mxu0
    %v609 = vmax.f32 %v607, 0.0
    %v610 = vadd.f32 %v124, %v609
    %v611 = vsel %vm125, %v585, 0.0
    %612 = vadd.xlane.f32.xlu0 %v611
    %v613 = vpop.xlane.xlu0 %612
    %v614 = vmul.f32 %v613, %v135
    %v615 = vsub.f32 %v585, %v614
    %v616 = vmul.f32 %v615, %v615
    %v617 = vsel %vm125, %v616, 0.0
    %618 = vadd.xlane.f32.xlu0 %v617
    %v619 = vpop.xlane.xlu0 %618
    %v620 = vmul.f32 %v619, %v135
    %v621 = vadd.f32 %v620, 0.0001
    %v622 = vrsqrt.pop %v621
    %v623 = vmul.f32 %v622, %v621
    %v624 = vmul.f32 %v623, %v622
    %v625 = vmul.f32 0.5, %v624
    %v626 = vsub.f32 1.5, %v625
    %v627 = vmul.f32 %v622, %v626
    %vm628 = vweird.f32 %v621
    %vm629 = vweird.f32 %v622
    %vm630 = vmor %vm628, %vm629
    %v631 = vsel %vm630, %v622, %v627
    %v632 = vmul.f32 %v615, %v631
    %v633 = vmul.f32 %v632, %v155
    %v634 = vadd.f32 %v633, %v157
    %v636 = vsel %vm125, %v634, 0
    %638 = vmatpush.msra.mxu0 0.0
    %639 = vmatpush.msra.mxu0 0.0
    %640 = vmatpush.msra.mxu0 0.0
    %641 = vmatpush.msra.mxu0 0.0
    %642 = vmatpush.msra.mxu0 0.0
    %643 = vmatpush.msra.mxu0 0.0
    %644 = vmatpush.msra.mxu0 0.0
    %645 = vmatpush.msra.mxu0 0.0
    %646 = vmatpush.msra.mxu0 0.0
    %647 = vmatpush.msra.mxu0 0.0
    %648 = vmatpush.msra.mxu0 0.0
    %649 = vmatpush.msra.mxu0 0.0
    %650 = vmatpush.msra.mxu0 %v111
    %651 = vmatpush.msra.mxu0 %v110
    %652 = vmatpush.msra.mxu0 %v109
    %653 = vmatpush.msra.mxu0 %v108
    %654 = vmatmul.f32.gmra.mxu0 %v636
    %v655 = vpop.f32.mrf.mxu0
    %v656 = vadd.f32 %v159, %v655
    %657 = vdwg.mxu0
    %v658 = vmax.f32 %v656, 0.0
    %v660 = vsel %vm125, %v658, 0
    %662 = vmatpush.msra.mxu0 0.0
    %663 = vmatpush.msra.mxu0 0.0
    %664 = vmatpush.msra.mxu0 0.0
    %665 = vmatpush.msra.mxu0 0.0
    %666 = vmatpush.msra.mxu0 0.0
    %667 = vmatpush.msra.mxu0 0.0
    %668 = vmatpush.msra.mxu0 0.0
    %669 = vmatpush.msra.mxu0 0.0
    %670 = vmatpush.msra.mxu0 0.0
    %671 = vmatpush.msra.mxu0 0.0
    %672 = vmatpush.msra.mxu0 0.0
    %673 = vmatpush.msra.mxu0 0.0
    %674 = vmatpush.msra.mxu0 %v116
    %675 = vmatpush.msra.mxu0 %v115
    %676 = vmatpush.msra.mxu0 %v114
    %677 = vmatpush.msra.mxu0 %v113
    %678 = vmatmul.f32.gmra.mxu0 %v660
    %v679 = vpop.f32.mrf.mxu0
    %v680 = vadd.f32 %v184, %v679
    %681 = vdwg.mxu0
    %v682 = vmax.f32 %v680, 0.0
    %v684 = vsel %vm125, %v682, 0
    %686 = vmatpush.msra.mxu0 0.0
    %687 = vmatpush.msra.mxu0 0.0
    %688 = vmatpush.msra.mxu0 0.0
    %689 = vmatpush.msra.mxu0 0.0
    %690 = vmatpush.msra.mxu0 0.0
    %691 = vmatpush.msra.mxu0 0.0
    %692 = vmatpush.msra.mxu0 0.0
    %693 = vmatpush.msra.mxu0 0.0
    %694 = vmatpush.msra.mxu0 0.0
    %695 = vmatpush.msra.mxu0 0.0
    %696 = vmatpush.msra.mxu0 0.0
    %697 = vmatpush.msra.mxu0 0.0
    %698 = vmatpush.msra.mxu0 %v121
    %699 = vmatpush.msra.mxu0 %v120
    %700 = vmatpush.msra.mxu0 %v119
    %701 = vmatpush.msra.mxu0 %v118
    %702 = vmatmul.f32.gmra.mxu0 %v684
    %v703 = vpop.f32.mrf.mxu0
    %v704 = vadd.f32 %v209, %v703
    %705 = vdwg.mxu0
    %v707 = vsel %vm125, %v704, 0
    %709 = vmatpush.xpose.msra.mxu0 0.0
    %710 = vmatpush.xpose.msra.mxu0 0.0
    %711 = vmatpush.xpose.msra.mxu0 0.0
    %712 = vmatpush.xpose.msra.mxu0 0.0
    %713 = vmatpush.xpose.msra.mxu0 0.0
    %714 = vmatpush.xpose.msra.mxu0 0.0
    %715 = vmatpush.xpose.msra.mxu0 0.0
    %716 = vmatpush.xpose.msra.mxu0 0.0
    %717 = vmatpush.xpose.msra.mxu0 0.0
    %718 = vmatpush.xpose.msra.mxu0 0.0
    %719 = vmatpush.xpose.msra.mxu0 0.0
    %720 = vmatpush.xpose.msra.mxu0 0.0
    %721 = vmatpush.xpose.msra.mxu0 0.0
    %722 = vmatpush.xpose.msra.mxu0 0.0
    %723 = vmatpush.xpose.msra.mxu0 0.0
    %724 = vmatpush.xpose.msra.mxu0 %v707
    %725 = vmatmul.f32.gmra.mxu0 %v707
    %v726 = vpop.f32.mrf.mxu0
    %v727 = vadd.f32 0.0, %v726
    %728 = vdwg.mxu0
    %v729 = vmul.f32 %v727, 0.17677669
    %v730 = vxor.u32 %v729, 2147483648
    %v731 = vmul.f32 %v730, 1.442695
    %v732 = vpow.pop %v731
    %v733 = vadd.f32 %v732, 1.0
    %v734 = vrcp.pop %v733
    %v735 = vmul.f32 %v733, %v734
    %v736 = vsub.f32 1.0, %v735
    %v737 = vmul.f32 %v734, %v736
    %v738 = vadd.f32 %v734, %v737
    %vm739 = vweird.f32 %v733
    %vm740 = vweird.f32 %v734
    %vm741 = vmor %vm739, %vm740
    %v742 = vsel %vm741, %v734, %v738
    %v743 = vand.u32 2147483647, %v733
    %vm744 = vcmp.eq.f32.partialorder %v743, 8.507059e+37
    %v745 = vand.u32 %v733, 2147483648
    %v746 = vor.u32 1.1754944e-38, %v745
    %v747 = vsel %vm744, %v746, %v742
    %v748 = vmul.f32 1.0, %v747
    %v749 = vsub.f32 %v748, 0.5
    %v750 = vmul.f32 %v749, 100.0
    %v751 = vxor.u32 %v750, 2147483648
    %v752 = vmul.f32 %v751, 1.442695
    %v753 = vpow.pop %v752
    %v754 = vadd.f32 %v753, 1.0
    %v755 = vrcp.pop %v754
    %v756 = vmul.f32 %v754, %v755
    %v757 = vsub.f32 1.0, %v756
    %v758 = vmul.f32 %v755, %v757
    %v759 = vadd.f32 %v755, %v758
    %vm760 = vweird.f32 %v754
    %vm761 = vweird.f32 %v755
    %vm762 = vmor %vm760, %vm761
    %v763 = vsel %vm762, %v755, %v759
    %v764 = vand.u32 2147483647, %v754
    %vm765 = vcmp.eq.f32.partialorder %v764, 8.507059e+37
    %v766 = vand.u32 %v754, 2147483648
    %v767 = vor.u32 1.1754944e-38, %v766
    %v768 = vsel %vm765, %v767, %v763
    %v769 = vmul.f32 1.0, %v768
    %v770 = vsub.f32 1.0, %v769
    %772 = vrot.lane.b32.xlu0 %v770, 8
    %v773 = vpop.permute.xlu0 %772
    %775 = vrot.lane.b32.xlu0 %v770, 16
    %v776 = vpop.permute.xlu0 %775
    %778 = vrot.lane.b32.xlu0 %v770, 24
    %v779 = vpop.permute.xlu0 %778
    %781 = vrot.lane.b32.xlu0 %v770, 32
    %v782 = vpop.permute.xlu0 %781
    %784 = vrot.lane.b32.xlu0 %v770, 40
    %v785 = vpop.permute.xlu0 %784
    %787 = vrot.lane.b32.xlu0 %v770, 48
    %v788 = vpop.permute.xlu0 %787
    %790 = vrot.lane.b32.xlu0 %v770, 56
    %v791 = vpop.permute.xlu0 %790
    %v793 = vsel %vm320, %v770, %v773
    %v794 = vsel %vm322, %v793, %v776
    %v795 = vsel %vm324, %v794, %v779
    %v796 = vsel %vm125, %v795, %v782
    %v797 = vsel %vm327, %v796, %v785
    %v798 = vsel %vm329, %v797, %v788
    %v799 = vsel %vm331, %v798, %v791
    %v800 = vsel %vm125, %v610, 0.0
    %801 = vadd.xlane.f32.xlu0 %v800
    %v802 = vpop.xlane.xlu0 %801
    %v803 = vmul.f32 %v802, %v135
    %v804 = vsub.f32 %v610, %v803
    %v805 = vmul.f32 %v804, %v804
    %v806 = vsel %vm125, %v805, 0.0
    %807 = vadd.xlane.f32.xlu0 %v806
    %v808 = vpop.xlane.xlu0 %807
    %v809 = vmul.f32 %v808, %v135
    %v810 = vadd.f32 %v809, 0.0001
    %v811 = vrsqrt.pop %v810
    %v812 = vmul.f32 %v811, %v810
    %v813 = vmul.f32 %v812, %v811
    %v814 = vmul.f32 0.5, %v813
    %v815 = vsub.f32 1.5, %v814
    %v816 = vmul.f32 %v811, %v815
    %vm817 = vweird.f32 %v810
    %vm818 = vweird.f32 %v811
    %vm819 = vmor %vm817, %vm818
    %v820 = vsel %vm819, %v811, %v816
    %v821 = vmul.f32 %v804, %v820
    %v822 = vmul.f32 %v821, %v155
    %v823 = vadd.f32 %v822, %v157
    %v825 = vsel %vm125, %v823, 0
    %827 = vmatpush.msra.mxu0 0.0
    %828 = vmatpush.msra.mxu0 0.0
    %829 = vmatpush.msra.mxu0 0.0
    %830 = vmatpush.msra.mxu0 0.0
    %831 = vmatpush.msra.mxu0 0.0
    %832 = vmatpush.msra.mxu0 0.0
    %833 = vmatpush.msra.mxu0 0.0
    %834 = vmatpush.msra.mxu0 0.0
    %835 = vmatpush.msra.mxu0 0.0
    %836 = vmatpush.msra.mxu0 0.0
    %837 = vmatpush.msra.mxu0 0.0
    %838 = vmatpush.msra.mxu0 0.0
    %839 = vmatpush.msra.mxu0 %v111
    %840 = vmatpush.msra.mxu0 %v110
    %841 = vmatpush.msra.mxu0 %v109
    %842 = vmatpush.msra.mxu0 %v108
    %843 = vmatmul.f32.gmra.mxu0 %v825
    %v844 = vpop.f32.mrf.mxu0
    %v845 = vadd.f32 %v159, %v844
    %846 = vdwg.mxu0
    %v847 = vmax.f32 %v845, 0.0
    %v849 = vsel %vm125, %v847, 0
    %851 = vmatpush.msra.mxu0 0.0
    %852 = vmatpush.msra.mxu0 0.0
    %853 = vmatpush.msra.mxu0 0.0
    %854 = vmatpush.msra.mxu0 0.0
    %855 = vmatpush.msra.mxu0 0.0
    %856 = vmatpush.msra.mxu0 0.0
    %857 = vmatpush.msra.mxu0 0.0
    %858 = vmatpush.msra.mxu0 0.0
    %859 = vmatpush.msra.mxu0 0.0
    %860 = vmatpush.msra.mxu0 0.0
    %861 = vmatpush.msra.mxu0 0.0
    %862 = vmatpush.msra.mxu0 0.0
    %863 = vmatpush.msra.mxu0 %v116
    %864 = vmatpush.msra.mxu0 %v115
    %865 = vmatpush.msra.mxu0 %v114
    %866 = vmatpush.msra.mxu0 %v113
    %867 = vmatmul.f32.gmra.mxu0 %v849
    %v868 = vpop.f32.mrf.mxu0
    %v869 = vadd.f32 %v184, %v868
    %870 = vdwg.mxu0
    %v871 = vmax.f32 %v869, 0.0
    %v873 = vsel %vm125, %v871, 0
    %875 = vmatpush.msra.mxu0 0.0
    %876 = vmatpush.msra.mxu0 0.0
    %877 = vmatpush.msra.mxu0 0.0
    %878 = vmatpush.msra.mxu0 0.0
    %879 = vmatpush.msra.mxu0 0.0
    %880 = vmatpush.msra.mxu0 0.0
    %881 = vmatpush.msra.mxu0 0.0
    %882 = vmatpush.msra.mxu0 0.0
    %883 = vmatpush.msra.mxu0 0.0
    %884 = vmatpush.msra.mxu0 0.0
    %885 = vmatpush.msra.mxu0 0.0
    %886 = vmatpush.msra.mxu0 0.0
    %887 = vmatpush.msra.mxu0 %v121
    %888 = vmatpush.msra.mxu0 %v120
    %889 = vmatpush.msra.mxu0 %v119
    %890 = vmatpush.msra.mxu0 %v118
    %891 = vmatmul.f32.gmra.mxu0 %v873
    %v892 = vpop.f32.mrf.mxu0
    %v893 = vadd.f32 %v209, %v892
    %894 = vdwg.mxu0
    %v896 = vsel %vm125, %v893, 0
    %898 = vmatpush.xpose.msra.mxu0 0.0
    %899 = vmatpush.xpose.msra.mxu0 0.0
    %900 = vmatpush.xpose.msra.mxu0 0.0
    %901 = vmatpush.xpose.msra.mxu0 0.0
    %902 = vmatpush.xpose.msra.mxu0 0.0
    %903 = vmatpush.xpose.msra.mxu0 0.0
    %904 = vmatpush.xpose.msra.mxu0 0.0
    %905 = vmatpush.xpose.msra.mxu0 0.0
    %906 = vmatpush.xpose.msra.mxu0 0.0
    %907 = vmatpush.xpose.msra.mxu0 0.0
    %908 = vmatpush.xpose.msra.mxu0 0.0
    %909 = vmatpush.xpose.msra.mxu0 0.0
    %910 = vmatpush.xpose.msra.mxu0 0.0
    %911 = vmatpush.xpose.msra.mxu0 0.0
    %912 = vmatpush.xpose.msra.mxu0 0.0
    %913 = vmatpush.xpose.msra.mxu0 %v896
    %914 = vmatmul.f32.gmra.mxu0 %v896
    %v915 = vpop.f32.mrf.mxu0
    %v916 = vadd.f32 0.0, %v915
    %917 = vdwg.mxu0
    %v918 = vmul.f32 %v916, 0.17677669
    %v919 = vxor.u32 %v918, 2147483648
    %v920 = vmul.f32 %v919, 1.442695
    %v921 = vpow.pop %v920
    %v922 = vadd.f32 %v921, 1.0
    %v923 = vrcp.pop %v922
    %v924 = vmul.f32 %v922, %v923
    %v925 = vsub.f32 1.0, %v924
    %v926 = vmul.f32 %v923, %v925
    %v927 = vadd.f32 %v923, %v926
    %vm928 = vweird.f32 %v922
    %vm929 = vweird.f32 %v923
    %vm930 = vmor %vm928, %vm929
    %v931 = vsel %vm930, %v923, %v927
    %v932 = vand.u32 2147483647, %v922
    %vm933 = vcmp.eq.f32.partialorder %v932, 8.507059e+37
    %v934 = vand.u32 %v922, 2147483648
    %v935 = vor.u32 1.1754944e-38, %v934
    %v936 = vsel %vm933, %v935, %v931
    %v937 = vmul.f32 1.0, %v936
    %v938 = vsub.f32 %v937, 0.5
    %v939 = vmul.f32 %v938, 100.0
    %v940 = vxor.u32 %v939, 2147483648
    %v941 = vmul.f32 %v940, 1.442695
    %v942 = vpow.pop %v941
    %v943 = vadd.f32 %v942, 1.0
    %v944 = vrcp.pop %v943
    %v945 = vmul.f32 %v943, %v944
    %v946 = vsub.f32 1.0, %v945
    %v947 = vmul.f32 %v944, %v946
    %v948 = vadd.f32 %v944, %v947
    %vm949 = vweird.f32 %v943
    %vm950 = vweird.f32 %v944
    %vm951 = vmor %vm949, %vm950
    %v952 = vsel %vm951, %v944, %v948
    %v953 = vand.u32 2147483647, %v943
    %vm954 = vcmp.eq.f32.partialorder %v953, 8.507059e+37
    %v955 = vand.u32 %v943, 2147483648
    %v956 = vor.u32 1.1754944e-38, %v955
    %v957 = vsel %vm954, %v956, %v952
    %v958 = vmul.f32 1.0, %v957
    %v959 = vsub.f32 1.0, %v958
    %961 = vrot.lane.b32.xlu0 %v959, 8
    %v962 = vpop.permute.xlu0 %961
    %964 = vrot.lane.b32.xlu0 %v959, 16
    %v965 = vpop.permute.xlu0 %964
    %967 = vrot.lane.b32.xlu0 %v959, 24
    %v968 = vpop.permute.xlu0 %967
    %970 = vrot.lane.b32.xlu0 %v959, 32
    %v971 = vpop.permute.xlu0 %970
    %973 = vrot.lane.b32.xlu0 %v959, 40
    %v974 = vpop.permute.xlu0 %973
    %976 = vrot.lane.b32.xlu0 %v959, 48
    %v977 = vpop.permute.xlu0 %976
    %979 = vrot.lane.b32.xlu0 %v959, 56
    %v980 = vpop.permute.xlu0 %979
    %v982 = vsel %vm320, %v959, %v962
    %v983 = vsel %vm322, %v982, %v965
    %v984 = vsel %vm324, %v983, %v968
    %v985 = vsel %vm125, %v984, %v971
    %v986 = vsel %vm327, %v985, %v974
    %v987 = vsel %vm329, %v986, %v977
    %v988 = vsel %vm331, %v987, %v980
    %990 = vrot.lane.b32.xlu0 %v988, 64
    %v991 = vpop.permute.xlu0 %990
    %v993 = vsel %vm526, %v799, %v991
    %v994 = vld [vmem:[#allocation10 + $0x8] sm:$0xff]
    %v995 = vsub.f32 %v994, 1.0
    %v996 = vmul.f32 %v995, 100.0
    %v997 = vxor.u32 %v996, 2147483648
    %v998 = vmul.f32 %v997, 1.442695
    %v999 = vpow.pop %v998
    %v1000 = vadd.f32 %v999, 1.0
    %v1001 = vrcp.pop %v1000
    %v1002 = vmul.f32 %v1000, %v1001
    %v1003 = vsub.f32 1.0, %v1002
    %v1004 = vmul.f32 %v1001, %v1003
    %v1005 = vadd.f32 %v1001, %v1004
    %vm1006 = vweird.f32 %v1000
    %vm1007 = vweird.f32 %v1001
    %vm1008 = vmor %vm1006, %vm1007
    %v1009 = vsel %vm1008, %v1001, %v1005
    %v1010 = vand.u32 2147483647, %v1000
    %vm1011 = vcmp.eq.f32.partialorder %v1010, 8.507059e+37
    %v1012 = vand.u32 %v1000, 2147483648
    %v1013 = vor.u32 1.1754944e-38, %v1012
    %v1014 = vsel %vm1011, %v1013, %v1009
    %v1015 = vmul.f32 1.0, %v1014
    %v1016 = vsub.f32 1.0, %v1015
    %v1017 = vmul.f32 %v993, %v1016
    %1018 = vst [vmem:[#allocation12 + $0x8] sm:$0xff] %v1017
    %s1019 = scalar_lea.vmem [#allocation8], 32
    %v1020 = vld [vmem:[%s1019] sm:$0xff]
    %v1021 = vld [vmem:[%s1019 + $0x8] sm:$0xff]
    %v1022 = vld [vmem:[%s1019 + $0x10] sm:$0xff]
    %v1023 = vld [vmem:[%s1019 + $0x18] sm:$0xff]
    %s1024 = scalar_lea.vmem %s4, 1
    %v1025 = vld [vmem:[%s1024] sm:$0x1]
    %v1027 = vperm.slane %v1025, 0
    %v1030 = vsel %vm125, %v585, 0
    %1032 = vmatpush.msra.mxu0 0.0
    %1033 = vmatpush.msra.mxu0 0.0
    %1034 = vmatpush.msra.mxu0 0.0
    %1035 = vmatpush.msra.mxu0 0.0
    %1036 = vmatpush.msra.mxu0 0.0
    %1037 = vmatpush.msra.mxu0 0.0
    %1038 = vmatpush.msra.mxu0 0.0
    %1039 = vmatpush.msra.mxu0 0.0
    %1040 = vmatpush.msra.mxu0 0.0
    %1041 = vmatpush.msra.mxu0 0.0
    %1042 = vmatpush.msra.mxu0 0.0
    %1043 = vmatpush.msra.mxu0 0.0
    %1044 = vmatpush.msra.mxu0 %v1023
    %1045 = vmatpush.msra.mxu0 %v1022
    %1046 = vmatpush.msra.mxu0 %v1021
    %1047 = vmatpush.msra.mxu0 %v1020
    %1048 = vmatmul.f32.gmra.mxu0 %v1030
    %v1049 = vpop.f32.mrf.mxu0
    %v1050 = vadd.f32 %v1027, %v1049
    %1051 = vdwg.mxu0
    %v1052 = vmax.f32 %v1050, 0.0
    %v1053 = vadd.f32 %v585, %v1052
    %v1055 = vsel %vm125, %v610, 0
    %1057 = vmatpush.msra.mxu0 0.0
    %1058 = vmatpush.msra.mxu0 0.0
    %1059 = vmatpush.msra.mxu0 0.0
    %1060 = vmatpush.msra.mxu0 0.0
    %1061 = vmatpush.msra.mxu0 0.0
    %1062 = vmatpush.msra.mxu0 0.0
    %1063 = vmatpush.msra.mxu0 0.0
    %1064 = vmatpush.msra.mxu0 0.0
    %1065 = vmatpush.msra.mxu0 0.0
    %1066 = vmatpush.msra.mxu0 0.0
    %1067 = vmatpush.msra.mxu0 0.0
    %1068 = vmatpush.msra.mxu0 0.0
    %1069 = vmatpush.msra.mxu0 %v1023
    %1070 = vmatpush.msra.mxu0 %v1022
    %1071 = vmatpush.msra.mxu0 %v1021
    %1072 = vmatpush.msra.mxu0 %v1020
    %1073 = vmatmul.f32.gmra.mxu0 %v1055
    %v1074 = vpop.f32.mrf.mxu0
    %v1075 = vadd.f32 %v1027, %v1074
    %1076 = vdwg.mxu0
    %v1077 = vmax.f32 %v1075, 0.0
    %v1078 = vadd.f32 %v610, %v1077
    %v1079 = vsel %vm125, %v1053, 0.0
    %1080 = vadd.xlane.f32.xlu0 %v1079
    %v1081 = vpop.xlane.xlu0 %1080
    %v1082 = vmul.f32 %v1081, %v135
    %v1083 = vsub.f32 %v1053, %v1082
    %v1084 = vmul.f32 %v1083, %v1083
    %v1085 = vsel %vm125, %v1084, 0.0
    %1086 = vadd.xlane.f32.xlu0 %v1085
    %v1087 = vpop.xlane.xlu0 %1086
    %v1088 = vmul.f32 %v1087, %v135
    %v1089 = vadd.f32 %v1088, 0.0001
    %v1090 = vrsqrt.pop %v1089
    %v1091 = vmul.f32 %v1090, %v1089
    %v1092 = vmul.f32 %v1091, %v1090
    %v1093 = vmul.f32 0.5, %v1092
    %v1094 = vsub.f32 1.5, %v1093
    %v1095 = vmul.f32 %v1090, %v1094
    %vm1096 = vweird.f32 %v1089
    %vm1097 = vweird.f32 %v1090
    %vm1098 = vmor %vm1096, %vm1097
    %v1099 = vsel %vm1098, %v1090, %v1095
    %v1100 = vmul.f32 %v1083, %v1099
    %v1101 = vmul.f32 %v1100, %v155
    %v1102 = vadd.f32 %v1101, %v157
    %v1104 = vsel %vm125, %v1102, 0
    %1106 = vmatpush.msra.mxu0 0.0
    %1107 = vmatpush.msra.mxu0 0.0
    %1108 = vmatpush.msra.mxu0 0.0
    %1109 = vmatpush.msra.mxu0 0.0
    %1110 = vmatpush.msra.mxu0 0.0
    %1111 = vmatpush.msra.mxu0 0.0
    %1112 = vmatpush.msra.mxu0 0.0
    %1113 = vmatpush.msra.mxu0 0.0
    %1114 = vmatpush.msra.mxu0 0.0
    %1115 = vmatpush.msra.mxu0 0.0
    %1116 = vmatpush.msra.mxu0 0.0
    %1117 = vmatpush.msra.mxu0 0.0
    %1118 = vmatpush.msra.mxu0 %v111
    %1119 = vmatpush.msra.mxu0 %v110
    %1120 = vmatpush.msra.mxu0 %v109
    %1121 = vmatpush.msra.mxu0 %v108
    %1122 = vmatmul.f32.gmra.mxu0 %v1104
    %v1123 = vpop.f32.mrf.mxu0
    %v1124 = vadd.f32 %v159, %v1123
    %1125 = vdwg.mxu0
    %v1126 = vmax.f32 %v1124, 0.0
    %v1128 = vsel %vm125, %v1126, 0
    %1130 = vmatpush.msra.mxu0 0.0
    %1131 = vmatpush.msra.mxu0 0.0
    %1132 = vmatpush.msra.mxu0 0.0
    %1133 = vmatpush.msra.mxu0 0.0
    %1134 = vmatpush.msra.mxu0 0.0
    %1135 = vmatpush.msra.mxu0 0.0
    %1136 = vmatpush.msra.mxu0 0.0
    %1137 = vmatpush.msra.mxu0 0.0
    %1138 = vmatpush.msra.mxu0 0.0
    %1139 = vmatpush.msra.mxu0 0.0
    %1140 = vmatpush.msra.mxu0 0.0
    %1141 = vmatpush.msra.mxu0 0.0
    %1142 = vmatpush.msra.mxu0 %v116
    %1143 = vmatpush.msra.mxu0 %v115
    %1144 = vmatpush.msra.mxu0 %v114
    %1145 = vmatpush.msra.mxu0 %v113
    %1146 = vmatmul.f32.gmra.mxu0 %v1128
    %v1147 = vpop.f32.mrf.mxu0
    %v1148 = vadd.f32 %v184, %v1147
    %1149 = vdwg.mxu0
    %v1150 = vmax.f32 %v1148, 0.0
    %v1152 = vsel %vm125, %v1150, 0
    %1154 = vmatpush.msra.mxu0 0.0
    %1155 = vmatpush.msra.mxu0 0.0
    %1156 = vmatpush.msra.mxu0 0.0
    %1157 = vmatpush.msra.mxu0 0.0
    %1158 = vmatpush.msra.mxu0 0.0
    %1159 = vmatpush.msra.mxu0 0.0
    %1160 = vmatpush.msra.mxu0 0.0
    %1161 = vmatpush.msra.mxu0 0.0
    %1162 = vmatpush.msra.mxu0 0.0
    %1163 = vmatpush.msra.mxu0 0.0
    %1164 = vmatpush.msra.mxu0 0.0
    %1165 = vmatpush.msra.mxu0 0.0
    %1166 = vmatpush.msra.mxu0 %v121
    %1167 = vmatpush.msra.mxu0 %v120
    %1168 = vmatpush.msra.mxu0 %v119
    %1169 = vmatpush.msra.mxu0 %v118
    %1170 = vmatmul.f32.gmra.mxu0 %v1152
    %v1171 = vpop.f32.mrf.mxu0
    %v1172 = vadd.f32 %v209, %v1171
    %1173 = vdwg.mxu0
    %v1175 = vsel %vm125, %v1172, 0
    %1177 = vmatpush.xpose.msra.mxu0 0.0
    %1178 = vmatpush.xpose.msra.mxu0 0.0
    %1179 = vmatpush.xpose.msra.mxu0 0.0
    %1180 = vmatpush.xpose.msra.mxu0 0.0
    %1181 = vmatpush.xpose.msra.mxu0 0.0
    %1182 = vmatpush.xpose.msra.mxu0 0.0
    %1183 = vmatpush.xpose.msra.mxu0 0.0
    %1184 = vmatpush.xpose.msra.mxu0 0.0
    %1185 = vmatpush.xpose.msra.mxu0 0.0
    %1186 = vmatpush.xpose.msra.mxu0 0.0
    %1187 = vmatpush.xpose.msra.mxu0 0.0
    %1188 = vmatpush.xpose.msra.mxu0 0.0
    %1189 = vmatpush.xpose.msra.mxu0 0.0
    %1190 = vmatpush.xpose.msra.mxu0 0.0
    %1191 = vmatpush.xpose.msra.mxu0 0.0
    %1192 = vmatpush.xpose.msra.mxu0 %v1175
    %1193 = vmatmul.f32.gmra.mxu0 %v1175
    %v1194 = vpop.f32.mrf.mxu0
    %v1195 = vadd.f32 0.0, %v1194
    %1196 = vdwg.mxu0
    %v1197 = vmul.f32 %v1195, 0.17677669
    %v1198 = vxor.u32 %v1197, 2147483648
    %v1199 = vmul.f32 %v1198, 1.442695
    %v1200 = vpow.pop %v1199
    %v1201 = vadd.f32 %v1200, 1.0
    %v1202 = vrcp.pop %v1201
    %v1203 = vmul.f32 %v1201, %v1202
    %v1204 = vsub.f32 1.0, %v1203
    %v1205 = vmul.f32 %v1202, %v1204
    %v1206 = vadd.f32 %v1202, %v1205
    %vm1207 = vweird.f32 %v1201
    %vm1208 = vweird.f32 %v1202
    %vm1209 = vmor %vm1207, %vm1208
    %v1210 = vsel %vm1209, %v1202, %v1206
    %v1211 = vand.u32 2147483647, %v1201
    %vm1212 = vcmp.eq.f32.partialorder %v1211, 8.507059e+37
    %v1213 = vand.u32 %v1201, 2147483648
    %v1214 = vor.u32 1.1754944e-38, %v1213
    %v1215 = vsel %vm1212, %v1214, %v1210
    %v1216 = vmul.f32 1.0, %v1215
    %v1217 = vsub.f32 %v1216, 0.5
    %v1218 = vmul.f32 %v1217, 100.0
    %v1219 = vxor.u32 %v1218, 2147483648
    %v1220 = vmul.f32 %v1219, 1.442695
    %v1221 = vpow.pop %v1220
    %v1222 = vadd.f32 %v1221, 1.0
    %v1223 = vrcp.pop %v1222
    %v1224 = vmul.f32 %v1222, %v1223
    %v1225 = vsub.f32 1.0, %v1224
    %v1226 = vmul.f32 %v1223, %v1225
    %v1227 = vadd.f32 %v1223, %v1226
    %vm1228 = vweird.f32 %v1222
    %vm1229 = vweird.f32 %v1223
    %vm1230 = vmor %vm1228, %vm1229
    %v1231 = vsel %vm1230, %v1223, %v1227
    %v1232 = vand.u32 2147483647, %v1222
    %vm1233 = vcmp.eq.f32.partialorder %v1232, 8.507059e+37
    %v1234 = vand.u32 %v1222, 2147483648
    %v1235 = vor.u32 1.1754944e-38, %v1234
    %v1236 = vsel %vm1233, %v1235, %v1231
    %v1237 = vmul.f32 1.0, %v1236
    %v1238 = vsub.f32 1.0, %v1237
    %1240 = vrot.lane.b32.xlu0 %v1238, 8
    %v1241 = vpop.permute.xlu0 %1240
    %1243 = vrot.lane.b32.xlu0 %v1238, 16
    %v1244 = vpop.permute.xlu0 %1243
    %1246 = vrot.lane.b32.xlu0 %v1238, 24
    %v1247 = vpop.permute.xlu0 %1246
    %1249 = vrot.lane.b32.xlu0 %v1238, 32
    %v1250 = vpop.permute.xlu0 %1249
    %1252 = vrot.lane.b32.xlu0 %v1238, 40
    %v1253 = vpop.permute.xlu0 %1252
    %1255 = vrot.lane.b32.xlu0 %v1238, 48
    %v1256 = vpop.permute.xlu0 %1255
    %1258 = vrot.lane.b32.xlu0 %v1238, 56
    %v1259 = vpop.permute.xlu0 %1258
    %v1261 = vsel %vm320, %v1238, %v1241
    %v1262 = vsel %vm322, %v1261, %v1244
    %v1263 = vsel %vm324, %v1262, %v1247
    %v1264 = vsel %vm125, %v1263, %v1250
    %v1265 = vsel %vm327, %v1264, %v1253
    %v1266 = vsel %vm329, %v1265, %v1256
    %v1267 = vsel %vm331, %v1266, %v1259
    %v1268 = vsel %vm125, %v1078, 0.0
    %1269 = vadd.xlane.f32.xlu0 %v1268
    %v1270 = vpop.xlane.xlu0 %1269
    %v1271 = vmul.f32 %v1270, %v135
    %v1272 = vsub.f32 %v1078, %v1271
    %v1273 = vmul.f32 %v1272, %v1272
    %v1274 = vsel %vm125, %v1273, 0.0
    %1275 = vadd.xlane.f32.xlu0 %v1274
    %v1276 = vpop.xlane.xlu0 %1275
    %v1277 = vmul.f32 %v1276, %v135
    %v1278 = vadd.f32 %v1277, 0.0001
    %v1279 = vrsqrt.pop %v1278
    %v1280 = vmul.f32 %v1279, %v1278
    %v1281 = vmul.f32 %v1280, %v1279
    %v1282 = vmul.f32 0.5, %v1281
    %v1283 = vsub.f32 1.5, %v1282
    %v1284 = vmul.f32 %v1279, %v1283
    %vm1285 = vweird.f32 %v1278
    %vm1286 = vweird.f32 %v1279
    %vm1287 = vmor %vm1285, %vm1286
    %v1288 = vsel %vm1287, %v1279, %v1284
    %v1289 = vmul.f32 %v1272, %v1288
    %v1290 = vmul.f32 %v1289, %v155
    %v1291 = vadd.f32 %v1290, %v157
    %v1293 = vsel %vm125, %v1291, 0
    %1295 = vmatpush.msra.mxu0 0.0
    %1296 = vmatpush.msra.mxu0 0.0
    %1297 = vmatpush.msra.mxu0 0.0
    %1298 = vmatpush.msra.mxu0 0.0
    %1299 = vmatpush.msra.mxu0 0.0
    %1300 = vmatpush.msra.mxu0 0.0
    %1301 = vmatpush.msra.mxu0 0.0
    %1302 = vmatpush.msra.mxu0 0.0
    %1303 = vmatpush.msra.mxu0 0.0
    %1304 = vmatpush.msra.mxu0 0.0
    %1305 = vmatpush.msra.mxu0 0.0
    %1306 = vmatpush.msra.mxu0 0.0
    %1307 = vmatpush.msra.mxu0 %v111
    %1308 = vmatpush.msra.mxu0 %v110
    %1309 = vmatpush.msra.mxu0 %v109
    %1310 = vmatpush.msra.mxu0 %v108
    %1311 = vmatmul.f32.gmra.mxu0 %v1293
    %v1312 = vpop.f32.mrf.mxu0
    %v1313 = vadd.f32 %v159, %v1312
    %1314 = vdwg.mxu0
    %v1315 = vmax.f32 %v1313, 0.0
    %v1317 = vsel %vm125, %v1315, 0
    %1319 = vmatpush.msra.mxu0 0.0
    %1320 = vmatpush.msra.mxu0 0.0
    %1321 = vmatpush.msra.mxu0 0.0
    %1322 = vmatpush.msra.mxu0 0.0
    %1323 = vmatpush.msra.mxu0 0.0
    %1324 = vmatpush.msra.mxu0 0.0
    %1325 = vmatpush.msra.mxu0 0.0
    %1326 = vmatpush.msra.mxu0 0.0
    %1327 = vmatpush.msra.mxu0 0.0
    %1328 = vmatpush.msra.mxu0 0.0
    %1329 = vmatpush.msra.mxu0 0.0
    %1330 = vmatpush.msra.mxu0 0.0
    %1331 = vmatpush.msra.mxu0 %v116
    %1332 = vmatpush.msra.mxu0 %v115
    %1333 = vmatpush.msra.mxu0 %v114
    %1334 = vmatpush.msra.mxu0 %v113
    %1335 = vmatmul.f32.gmra.mxu0 %v1317
    %v1336 = vpop.f32.mrf.mxu0
    %v1337 = vadd.f32 %v184, %v1336
    %1338 = vdwg.mxu0
    %v1339 = vmax.f32 %v1337, 0.0
    %v1341 = vsel %vm125, %v1339, 0
    %1343 = vmatpush.msra.mxu0 0.0
    %1344 = vmatpush.msra.mxu0 0.0
    %1345 = vmatpush.msra.mxu0 0.0
    %1346 = vmatpush.msra.mxu0 0.0
    %1347 = vmatpush.msra.mxu0 0.0
    %1348 = vmatpush.msra.mxu0 0.0
    %1349 = vmatpush.msra.mxu0 0.0
    %1350 = vmatpush.msra.mxu0 0.0
    %1351 = vmatpush.msra.mxu0 0.0
    %1352 = vmatpush.msra.mxu0 0.0
    %1353 = vmatpush.msra.mxu0 0.0
    %1354 = vmatpush.msra.mxu0 0.0
    %1355 = vmatpush.msra.mxu0 %v121
    %1356 = vmatpush.msra.mxu0 %v120
    %1357 = vmatpush.msra.mxu0 %v119
    %1358 = vmatpush.msra.mxu0 %v118
    %1359 = vmatmul.f32.gmra.mxu0 %v1341
    %v1360 = vpop.f32.mrf.mxu0
    %v1361 = vadd.f32 %v209, %v1360
    %1362 = vdwg.mxu0
    %v1364 = vsel %vm125, %v1361, 0
    %1366 = vmatpush.xpose.msra.mxu0 0.0
    %1367 = vmatpush.xpose.msra.mxu0 0.0
    %1368 = vmatpush.xpose.msra.mxu0 0.0
    %1369 = vmatpush.xpose.msra.mxu0 0.0
    %1370 = vmatpush.xpose.msra.mxu0 0.0
    %1371 = vmatpush.xpose.msra.mxu0 0.0
    %1372 = vmatpush.xpose.msra.mxu0 0.0
    %1373 = vmatpush.xpose.msra.mxu0 0.0
    %1374 = vmatpush.xpose.msra.mxu0 0.0
    %1375 = vmatpush.xpose.msra.mxu0 0.0
    %1376 = vmatpush.xpose.msra.mxu0 0.0
    %1377 = vmatpush.xpose.msra.mxu0 0.0
    %1378 = vmatpush.xpose.msra.mxu0 0.0
    %1379 = vmatpush.xpose.msra.mxu0 0.0
    %1380 = vmatpush.xpose.msra.mxu0 0.0
    %1381 = vmatpush.xpose.msra.mxu0 %v1364
    %1382 = vmatmul.f32.gmra.mxu0 %v1364
    %v1383 = vpop.f32.mrf.mxu0
    %v1384 = vadd.f32 0.0, %v1383
    %1385 = vdwg.mxu0
    %v1386 = vmul.f32 %v1384, 0.17677669
    %v1387 = vxor.u32 %v1386, 2147483648
    %v1388 = vmul.f32 %v1387, 1.442695
    %v1389 = vpow.pop %v1388
    %v1390 = vadd.f32 %v1389, 1.0
    %v1391 = vrcp.pop %v1390
    %v1392 = vmul.f32 %v1390, %v1391
    %v1393 = vsub.f32 1.0, %v1392
    %v1394 = vmul.f32 %v1391, %v1393
    %v1395 = vadd.f32 %v1391, %v1394
    %vm1396 = vweird.f32 %v1390
    %vm1397 = vweird.f32 %v1391
    %vm1398 = vmor %vm1396, %vm1397
    %v1399 = vsel %vm1398, %v1391, %v1395
    %v1400 = vand.u32 2147483647, %v1390
    %vm1401 = vcmp.eq.f32.partialorder %v1400, 8.507059e+37
    %v1402 = vand.u32 %v1390, 2147483648
    %v1403 = vor.u32 1.1754944e-38, %v1402
    %v1404 = vsel %vm1401, %v1403, %v1399
    %v1405 = vmul.f32 1.0, %v1404
    %v1406 = vsub.f32 %v1405, 0.5
    %v1407 = vmul.f32 %v1406, 100.0
    %v1408 = vxor.u32 %v1407, 2147483648
    %v1409 = vmul.f32 %v1408, 1.442695
    %v1410 = vpow.pop %v1409
    %v1411 = vadd.f32 %v1410, 1.0
    %v1412 = vrcp.pop %v1411
    %v1413 = vmul.f32 %v1411, %v1412
    %v1414 = vsub.f32 1.0, %v1413
    %v1415 = vmul.f32 %v1412, %v1414
    %v1416 = vadd.f32 %v1412, %v1415
    %vm1417 = vweird.f32 %v1411
    %vm1418 = vweird.f32 %v1412
    %vm1419 = vmor %vm1417, %vm1418
    %v1420 = vsel %vm1419, %v1412, %v1416
    %v1421 = vand.u32 2147483647, %v1411
    %vm1422 = vcmp.eq.f32.partialorder %v1421, 8.507059e+37
    %v1423 = vand.u32 %v1411, 2147483648
    %v1424 = vor.u32 1.1754944e-38, %v1423
    %v1425 = vsel %vm1422, %v1424, %v1420
    %v1426 = vmul.f32 1.0, %v1425
    %v1427 = vsub.f32 1.0, %v1426
    %1429 = vrot.lane.b32.xlu0 %v1427, 8
    %v1430 = vpop.permute.xlu0 %1429
    %1432 = vrot.lane.b32.xlu0 %v1427, 16
    %v1433 = vpop.permute.xlu0 %1432
    %1435 = vrot.lane.b32.xlu0 %v1427, 24
    %v1436 = vpop.permute.xlu0 %1435
    %1438 = vrot.lane.b32.xlu0 %v1427, 32
    %v1439 = vpop.permute.xlu0 %1438
    %1441 = vrot.lane.b32.xlu0 %v1427, 40
    %v1442 = vpop.permute.xlu0 %1441
    %1444 = vrot.lane.b32.xlu0 %v1427, 48
    %v1445 = vpop.permute.xlu0 %1444
    %1447 = vrot.lane.b32.xlu0 %v1427, 56
    %v1448 = vpop.permute.xlu0 %1447
    %v1450 = vsel %vm320, %v1427, %v1430
    %v1451 = vsel %vm322, %v1450, %v1433
    %v1452 = vsel %vm324, %v1451, %v1436
    %v1453 = vsel %vm125, %v1452, %v1439
    %v1454 = vsel %vm327, %v1453, %v1442
    %v1455 = vsel %vm329, %v1454, %v1445
    %v1456 = vsel %vm331, %v1455, %v1448
    %1458 = vrot.lane.b32.xlu0 %v1456, 64
    %v1459 = vpop.permute.xlu0 %1458
    %v1461 = vsel %vm526, %v1267, %v1459
    %v1462 = vld [vmem:[#allocation10 + $0x10] sm:$0xff]
    %v1463 = vsub.f32 %v1462, 1.0
    %v1464 = vmul.f32 %v1463, 100.0
    %v1465 = vxor.u32 %v1464, 2147483648
    %v1466 = vmul.f32 %v1465, 1.442695
    %v1467 = vpow.pop %v1466
    %v1468 = vadd.f32 %v1467, 1.0
    %v1469 = vrcp.pop %v1468
    %v1470 = vmul.f32 %v1468, %v1469
    %v1471 = vsub.f32 1.0, %v1470
    %v1472 = vmul.f32 %v1469, %v1471
    %v1473 = vadd.f32 %v1469, %v1472
    %vm1474 = vweird.f32 %v1468
    %vm1475 = vweird.f32 %v1469
    %vm1476 = vmor %vm1474, %vm1475
    %v1477 = vsel %vm1476, %v1469, %v1473
    %v1478 = vand.u32 2147483647, %v1468
    %vm1479 = vcmp.eq.f32.partialorder %v1478, 8.507059e+37
    %v1480 = vand.u32 %v1468, 2147483648
    %v1481 = vor.u32 1.1754944e-38, %v1480
    %v1482 = vsel %vm1479, %v1481, %v1477
    %v1483 = vmul.f32 1.0, %v1482
    %v1484 = vsub.f32 1.0, %v1483
    %v1485 = vmul.f32 %v1461, %v1484
    %1486 = vst [vmem:[#allocation12 + $0x10] sm:$0xff] %v1485
    %s1487 = scalar_lea.vmem [#allocation8], 64
    %v1488 = vld [vmem:[%s1487] sm:$0xff]
    %v1489 = vld [vmem:[%s1487 + $0x8] sm:$0xff]
    %v1490 = vld [vmem:[%s1487 + $0x10] sm:$0xff]
    %v1491 = vld [vmem:[%s1487 + $0x18] sm:$0xff]
    %s1492 = scalar_lea.vmem %s4, 2
    %v1493 = vld [vmem:[%s1492] sm:$0x1]
    %v1495 = vperm.slane %v1493, 0
    %v1498 = vsel %vm125, %v1053, 0
    %1500 = vmatpush.msra.mxu0 0.0
    %1501 = vmatpush.msra.mxu0 0.0
    %1502 = vmatpush.msra.mxu0 0.0
    %1503 = vmatpush.msra.mxu0 0.0
    %1504 = vmatpush.msra.mxu0 0.0
    %1505 = vmatpush.msra.mxu0 0.0
    %1506 = vmatpush.msra.mxu0 0.0
    %1507 = vmatpush.msra.mxu0 0.0
    %1508 = vmatpush.msra.mxu0 0.0
    %1509 = vmatpush.msra.mxu0 0.0
    %1510 = vmatpush.msra.mxu0 0.0
    %1511 = vmatpush.msra.mxu0 0.0
    %1512 = vmatpush.msra.mxu0 %v1491
    %1513 = vmatpush.msra.mxu0 %v1490
    %1514 = vmatpush.msra.mxu0 %v1489
    %1515 = vmatpush.msra.mxu0 %v1488
    %1516 = vmatmul.f32.gmra.mxu0 %v1498
    %v1517 = vpop.f32.mrf.mxu0
    %v1518 = vadd.f32 %v1495, %v1517
    %1519 = vdwg.mxu0
    %v1520 = vmax.f32 %v1518, 0.0
    %v1521 = vadd.f32 %v1053, %v1520
    %v1523 = vsel %vm125, %v1078, 0
    %1525 = vmatpush.msra.mxu0 0.0
    %1526 = vmatpush.msra.mxu0 0.0
    %1527 = vmatpush.msra.mxu0 0.0
    %1528 = vmatpush.msra.mxu0 0.0
    %1529 = vmatpush.msra.mxu0 0.0
    %1530 = vmatpush.msra.mxu0 0.0
    %1531 = vmatpush.msra.mxu0 0.0
    %1532 = vmatpush.msra.mxu0 0.0
    %1533 = vmatpush.msra.mxu0 0.0
    %1534 = vmatpush.msra.mxu0 0.0
    %1535 = vmatpush.msra.mxu0 0.0
    %1536 = vmatpush.msra.mxu0 0.0
    %1537 = vmatpush.msra.mxu0 %v1491
    %1538 = vmatpush.msra.mxu0 %v1490
    %1539 = vmatpush.msra.mxu0 %v1489
    %1540 = vmatpush.msra.mxu0 %v1488
    %1541 = vmatmul.f32.gmra.mxu0 %v1523
    %v1542 = vpop.f32.mrf.mxu0
    %v1543 = vadd.f32 %v1495, %v1542
    %1544 = vdwg.mxu0
    %v1545 = vmax.f32 %v1543, 0.0
    %v1546 = vadd.f32 %v1078, %v1545
    %v1547 = vsel %vm125, %v1521, 0.0
    %1548 = vadd.xlane.f32.xlu0 %v1547
    %v1549 = vpop.xlane.xlu0 %1548
    %v1550 = vmul.f32 %v1549, %v135
    %v1551 = vsub.f32 %v1521, %v1550
    %v1552 = vmul.f32 %v1551, %v1551
    %v1553 = vsel %vm125, %v1552, 0.0
    %1554 = vadd.xlane.f32.xlu0 %v1553
    %v1555 = vpop.xlane.xlu0 %1554
    %v1556 = vmul.f32 %v1555, %v135
    %v1557 = vadd.f32 %v1556, 0.0001
    %v1558 = vrsqrt.pop %v1557
    %v1559 = vmul.f32 %v1558, %v1557
    %v1560 = vmul.f32 %v1559, %v1558
    %v1561 = vmul.f32 0.5, %v1560
    %v1562 = vsub.f32 1.5, %v1561
    %v1563 = vmul.f32 %v1558, %v1562
    %vm1564 = vweird.f32 %v1557
    %vm1565 = vweird.f32 %v1558
    %vm1566 = vmor %vm1564, %vm1565
    %v1567 = vsel %vm1566, %v1558, %v1563
    %v1568 = vmul.f32 %v1551, %v1567
    %v1569 = vmul.f32 %v1568, %v155
    %v1570 = vadd.f32 %v1569, %v157
    %v1572 = vsel %vm125, %v1570, 0
    %1574 = vmatpush.msra.mxu0 0.0
    %1575 = vmatpush.msra.mxu0 0.0
    %1576 = vmatpush.msra.mxu0 0.0
    %1577 = vmatpush.msra.mxu0 0.0
    %1578 = vmatpush.msra.mxu0 0.0
    %1579 = vmatpush.msra.mxu0 0.0
    %1580 = vmatpush.msra.mxu0 0.0
    %1581 = vmatpush.msra.mxu0 0.0
    %1582 = vmatpush.msra.mxu0 0.0
    %1583 = vmatpush.msra.mxu0 0.0
    %1584 = vmatpush.msra.mxu0 0.0
    %1585 = vmatpush.msra.mxu0 0.0
    %1586 = vmatpush.msra.mxu0 %v111
    %1587 = vmatpush.msra.mxu0 %v110
    %1588 = vmatpush.msra.mxu0 %v109
    %1589 = vmatpush.msra.mxu0 %v108
    %1590 = vmatmul.f32.gmra.mxu0 %v1572
    %v1591 = vpop.f32.mrf.mxu0
    %v1592 = vadd.f32 %v159, %v1591
    %1593 = vdwg.mxu0
    %v1594 = vmax.f32 %v1592, 0.0
    %v1596 = vsel %vm125, %v1594, 0
    %1598 = vmatpush.msra.mxu0 0.0
    %1599 = vmatpush.msra.mxu0 0.0
    %1600 = vmatpush.msra.mxu0 0.0
    %1601 = vmatpush.msra.mxu0 0.0
    %1602 = vmatpush.msra.mxu0 0.0
    %1603 = vmatpush.msra.mxu0 0.0
    %1604 = vmatpush.msra.mxu0 0.0
    %1605 = vmatpush.msra.mxu0 0.0
    %1606 = vmatpush.msra.mxu0 0.0
    %1607 = vmatpush.msra.mxu0 0.0
    %1608 = vmatpush.msra.mxu0 0.0
    %1609 = vmatpush.msra.mxu0 0.0
    %1610 = vmatpush.msra.mxu0 %v116
    %1611 = vmatpush.msra.mxu0 %v115
    %1612 = vmatpush.msra.mxu0 %v114
    %1613 = vmatpush.msra.mxu0 %v113
    %1614 = vmatmul.f32.gmra.mxu0 %v1596
    %v1615 = vpop.f32.mrf.mxu0
    %v1616 = vadd.f32 %v184, %v1615
    %1617 = vdwg.mxu0
    %v1618 = vmax.f32 %v1616, 0.0
    %v1620 = vsel %vm125, %v1618, 0
    %1622 = vmatpush.msra.mxu0 0.0
    %1623 = vmatpush.msra.mxu0 0.0
    %1624 = vmatpush.msra.mxu0 0.0
    %1625 = vmatpush.msra.mxu0 0.0
    %1626 = vmatpush.msra.mxu0 0.0
    %1627 = vmatpush.msra.mxu0 0.0
    %1628 = vmatpush.msra.mxu0 0.0
    %1629 = vmatpush.msra.mxu0 0.0
    %1630 = vmatpush.msra.mxu0 0.0
    %1631 = vmatpush.msra.mxu0 0.0
    %1632 = vmatpush.msra.mxu0 0.0
    %1633 = vmatpush.msra.mxu0 0.0
    %1634 = vmatpush.msra.mxu0 %v121
    %1635 = vmatpush.msra.mxu0 %v120
    %1636 = vmatpush.msra.mxu0 %v119
    %1637 = vmatpush.msra.mxu0 %v118
    %1638 = vmatmul.f32.gmra.mxu0 %v1620
    %v1639 = vpop.f32.mrf.mxu0
    %v1640 = vadd.f32 %v209, %v1639
    %1641 = vdwg.mxu0
    %v1643 = vsel %vm125, %v1640, 0
    %1645 = vmatpush.xpose.msra.mxu0 0.0
    %1646 = vmatpush.xpose.msra.mxu0 0.0
    %1647 = vmatpush.xpose.msra.mxu0 0.0
    %1648 = vmatpush.xpose.msra.mxu0 0.0
    %1649 = vmatpush.xpose.msra.mxu0 0.0
    %1650 = vmatpush.xpose.msra.mxu0 0.0
    %1651 = vmatpush.xpose.msra.mxu0 0.0
    %1652 = vmatpush.xpose.msra.mxu0 0.0
    %1653 = vmatpush.xpose.msra.mxu0 0.0
    %1654 = vmatpush.xpose.msra.mxu0 0.0
    %1655 = vmatpush.xpose.msra.mxu0 0.0
    %1656 = vmatpush.xpose.msra.mxu0 0.0
    %1657 = vmatpush.xpose.msra.mxu0 0.0
    %1658 = vmatpush.xpose.msra.mxu0 0.0
    %1659 = vmatpush.xpose.msra.mxu0 0.0
    %1660 = vmatpush.xpose.msra.mxu0 %v1643
    %1661 = vmatmul.f32.gmra.mxu0 %v1643
    %v1662 = vpop.f32.mrf.mxu0
    %v1663 = vadd.f32 0.0, %v1662
    %1664 = vdwg.mxu0
    %v1665 = vmul.f32 %v1663, 0.17677669
    %v1666 = vxor.u32 %v1665, 2147483648
    %v1667 = vmul.f32 %v1666, 1.442695
    %v1668 = vpow.pop %v1667
    %v1669 = vadd.f32 %v1668, 1.0
    %v1670 = vrcp.pop %v1669
    %v1671 = vmul.f32 %v1669, %v1670
    %v1672 = vsub.f32 1.0, %v1671
    %v1673 = vmul.f32 %v1670, %v1672
    %v1674 = vadd.f32 %v1670, %v1673
    %vm1675 = vweird.f32 %v1669
    %vm1676 = vweird.f32 %v1670
    %vm1677 = vmor %vm1675, %vm1676
    %v1678 = vsel %vm1677, %v1670, %v1674
    %v1679 = vand.u32 2147483647, %v1669
    %vm1680 = vcmp.eq.f32.partialorder %v1679, 8.507059e+37
    %v1681 = vand.u32 %v1669, 2147483648
    %v1682 = vor.u32 1.1754944e-38, %v1681
    %v1683 = vsel %vm1680, %v1682, %v1678
    %v1684 = vmul.f32 1.0, %v1683
    %v1685 = vsub.f32 %v1684, 0.5
    %v1686 = vmul.f32 %v1685, 100.0
    %v1687 = vxor.u32 %v1686, 2147483648
    %v1688 = vmul.f32 %v1687, 1.442695
    %v1689 = vpow.pop %v1688
    %v1690 = vadd.f32 %v1689, 1.0
    %v1691 = vrcp.pop %v1690
    %v1692 = vmul.f32 %v1690, %v1691
    %v1693 = vsub.f32 1.0, %v1692
    %v1694 = vmul.f32 %v1691, %v1693
    %v1695 = vadd.f32 %v1691, %v1694
    %vm1696 = vweird.f32 %v1690
    %vm1697 = vweird.f32 %v1691
    %vm1698 = vmor %vm1696, %vm1697
    %v1699 = vsel %vm1698, %v1691, %v1695
    %v1700 = vand.u32 2147483647, %v1690
    %vm1701 = vcmp.eq.f32.partialorder %v1700, 8.507059e+37
    %v1702 = vand.u32 %v1690, 2147483648
    %v1703 = vor.u32 1.1754944e-38, %v1702
    %v1704 = vsel %vm1701, %v1703, %v1699
    %v1705 = vmul.f32 1.0, %v1704
    %v1706 = vsub.f32 1.0, %v1705
    %1708 = vrot.lane.b32.xlu0 %v1706, 8
    %v1709 = vpop.permute.xlu0 %1708
    %1711 = vrot.lane.b32.xlu0 %v1706, 16
    %v1712 = vpop.permute.xlu0 %1711
    %1714 = vrot.lane.b32.xlu0 %v1706, 24
    %v1715 = vpop.permute.xlu0 %1714
    %1717 = vrot.lane.b32.xlu0 %v1706, 32
    %v1718 = vpop.permute.xlu0 %1717
    %1720 = vrot.lane.b32.xlu0 %v1706, 40
    %v1721 = vpop.permute.xlu0 %1720
    %1723 = vrot.lane.b32.xlu0 %v1706, 48
    %v1724 = vpop.permute.xlu0 %1723
    %1726 = vrot.lane.b32.xlu0 %v1706, 56
    %v1727 = vpop.permute.xlu0 %1726
    %v1729 = vsel %vm320, %v1706, %v1709
    %v1730 = vsel %vm322, %v1729, %v1712
    %v1731 = vsel %vm324, %v1730, %v1715
    %v1732 = vsel %vm125, %v1731, %v1718
    %v1733 = vsel %vm327, %v1732, %v1721
    %v1734 = vsel %vm329, %v1733, %v1724
    %v1735 = vsel %vm331, %v1734, %v1727
    %v1736 = vsel %vm125, %v1546, 0.0
    %1737 = vadd.xlane.f32.xlu0 %v1736
    %v1738 = vpop.xlane.xlu0 %1737
    %v1739 = vmul.f32 %v1738, %v135
    %v1740 = vsub.f32 %v1546, %v1739
    %v1741 = vmul.f32 %v1740, %v1740
    %v1742 = vsel %vm125, %v1741, 0.0
    %1743 = vadd.xlane.f32.xlu0 %v1742
    %v1744 = vpop.xlane.xlu0 %1743
    %v1745 = vmul.f32 %v1744, %v135
    %v1746 = vadd.f32 %v1745, 0.0001
    %v1747 = vrsqrt.pop %v1746
    %v1748 = vmul.f32 %v1747, %v1746
    %v1749 = vmul.f32 %v1748, %v1747
    %v1750 = vmul.f32 0.5, %v1749
    %v1751 = vsub.f32 1.5, %v1750
    %v1752 = vmul.f32 %v1747, %v1751
    %vm1753 = vweird.f32 %v1746
    %vm1754 = vweird.f32 %v1747
    %vm1755 = vmor %vm1753, %vm1754
    %v1756 = vsel %vm1755, %v1747, %v1752
    %v1757 = vmul.f32 %v1740, %v1756
    %v1758 = vmul.f32 %v1757, %v155
    %v1759 = vadd.f32 %v1758, %v157
    %v1761 = vsel %vm125, %v1759, 0
    %1763 = vmatpush.msra.mxu0 0.0
    %1764 = vmatpush.msra.mxu0 0.0
    %1765 = vmatpush.msra.mxu0 0.0
    %1766 = vmatpush.msra.mxu0 0.0
    %1767 = vmatpush.msra.mxu0 0.0
    %1768 = vmatpush.msra.mxu0 0.0
    %1769 = vmatpush.msra.mxu0 0.0
    %1770 = vmatpush.msra.mxu0 0.0
    %1771 = vmatpush.msra.mxu0 0.0
    %1772 = vmatpush.msra.mxu0 0.0
    %1773 = vmatpush.msra.mxu0 0.0
    %1774 = vmatpush.msra.mxu0 0.0
    %1775 = vmatpush.msra.mxu0 %v111
    %1776 = vmatpush.msra.mxu0 %v110
    %1777 = vmatpush.msra.mxu0 %v109
    %1778 = vmatpush.msra.mxu0 %v108
    %1779 = vmatmul.f32.gmra.mxu0 %v1761
    %v1780 = vpop.f32.mrf.mxu0
    %v1781 = vadd.f32 %v159, %v1780
    %1782 = vdwg.mxu0
    %v1783 = vmax.f32 %v1781, 0.0
    %v1785 = vsel %vm125, %v1783, 0
    %1787 = vmatpush.msra.mxu0 0.0
    %1788 = vmatpush.msra.mxu0 0.0
    %1789 = vmatpush.msra.mxu0 0.0
    %1790 = vmatpush.msra.mxu0 0.0
    %1791 = vmatpush.msra.mxu0 0.0
    %1792 = vmatpush.msra.mxu0 0.0
    %1793 = vmatpush.msra.mxu0 0.0
    %1794 = vmatpush.msra.mxu0 0.0
    %1795 = vmatpush.msra.mxu0 0.0
    %1796 = vmatpush.msra.mxu0 0.0
    %1797 = vmatpush.msra.mxu0 0.0
    %1798 = vmatpush.msra.mxu0 0.0
    %1799 = vmatpush.msra.mxu0 %v116
    %1800 = vmatpush.msra.mxu0 %v115
    %1801 = vmatpush.msra.mxu0 %v114
    %1802 = vmatpush.msra.mxu0 %v113
    %1803 = vmatmul.f32.gmra.mxu0 %v1785
    %v1804 = vpop.f32.mrf.mxu0
    %v1805 = vadd.f32 %v184, %v1804
    %1806 = vdwg.mxu0
    %v1807 = vmax.f32 %v1805, 0.0
    %v1809 = vsel %vm125, %v1807, 0
    %1811 = vmatpush.msra.mxu0 0.0
    %1812 = vmatpush.msra.mxu0 0.0
    %1813 = vmatpush.msra.mxu0 0.0
    %1814 = vmatpush.msra.mxu0 0.0
    %1815 = vmatpush.msra.mxu0 0.0
    %1816 = vmatpush.msra.mxu0 0.0
    %1817 = vmatpush.msra.mxu0 0.0
    %1818 = vmatpush.msra.mxu0 0.0
    %1819 = vmatpush.msra.mxu0 0.0
    %1820 = vmatpush.msra.mxu0 0.0
    %1821 = vmatpush.msra.mxu0 0.0
    %1822 = vmatpush.msra.mxu0 0.0
    %1823 = vmatpush.msra.mxu0 %v121
    %1824 = vmatpush.msra.mxu0 %v120
    %1825 = vmatpush.msra.mxu0 %v119
    %1826 = vmatpush.msra.mxu0 %v118
    %1827 = vmatmul.f32.gmra.mxu0 %v1809
    %v1828 = vpop.f32.mrf.mxu0
    %v1829 = vadd.f32 %v209, %v1828
    %1830 = vdwg.mxu0
    %v1832 = vsel %vm125, %v1829, 0
    %1834 = vmatpush.xpose.msra.mxu0 0.0
    %1835 = vmatpush.xpose.msra.mxu0 0.0
    %1836 = vmatpush.xpose.msra.mxu0 0.0
    %1837 = vmatpush.xpose.msra.mxu0 0.0
    %1838 = vmatpush.xpose.msra.mxu0 0.0
    %1839 = vmatpush.xpose.msra.mxu0 0.0
    %1840 = vmatpush.xpose.msra.mxu0 0.0
    %1841 = vmatpush.xpose.msra.mxu0 0.0
    %1842 = vmatpush.xpose.msra.mxu0 0.0
    %1843 = vmatpush.xpose.msra.mxu0 0.0
    %1844 = vmatpush.xpose.msra.mxu0 0.0
    %1845 = vmatpush.xpose.msra.mxu0 0.0
    %1846 = vmatpush.xpose.msra.mxu0 0.0
    %1847 = vmatpush.xpose.msra.mxu0 0.0
    %1848 = vmatpush.xpose.msra.mxu0 0.0
    %1849 = vmatpush.xpose.msra.mxu0 %v1832
    %1850 = vmatmul.f32.gmra.mxu0 %v1832
    %v1851 = vpop.f32.mrf.mxu0
    %v1852 = vadd.f32 0.0, %v1851
    %1853 = vdwg.mxu0
    %v1854 = vmul.f32 %v1852, 0.17677669
    %v1855 = vxor.u32 %v1854, 2147483648
    %v1856 = vmul.f32 %v1855, 1.442695
    %v1857 = vpow.pop %v1856
    %v1858 = vadd.f32 %v1857, 1.0
    %v1859 = vrcp.pop %v1858
    %v1860 = vmul.f32 %v1858, %v1859
    %v1861 = vsub.f32 1.0, %v1860
    %v1862 = vmul.f32 %v1859, %v1861
    %v1863 = vadd.f32 %v1859, %v1862
    %vm1864 = vweird.f32 %v1858
    %vm1865 = vweird.f32 %v1859
    %vm1866 = vmor %vm1864, %vm1865
    %v1867 = vsel %vm1866, %v1859, %v1863
    %v1868 = vand.u32 2147483647, %v1858
    %vm1869 = vcmp.eq.f32.partialorder %v1868, 8.507059e+37
    %v1870 = vand.u32 %v1858, 2147483648
    %v1871 = vor.u32 1.1754944e-38, %v1870
    %v1872 = vsel %vm1869, %v1871, %v1867
    %v1873 = vmul.f32 1.0, %v1872
    %v1874 = vsub.f32 %v1873, 0.5
    %v1875 = vmul.f32 %v1874, 100.0
    %v1876 = vxor.u32 %v1875, 2147483648
    %v1877 = vmul.f32 %v1876, 1.442695
    %v1878 = vpow.pop %v1877
    %v1879 = vadd.f32 %v1878, 1.0
    %v1880 = vrcp.pop %v1879
    %v1881 = vmul.f32 %v1879, %v1880
    %v1882 = vsub.f32 1.0, %v1881
    %v1883 = vmul.f32 %v1880, %v1882
    %v1884 = vadd.f32 %v1880, %v1883
    %vm1885 = vweird.f32 %v1879
    %vm1886 = vweird.f32 %v1880
    %vm1887 = vmor %vm1885, %vm1886
    %v1888 = vsel %vm1887, %v1880, %v1884
    %v1889 = vand.u32 2147483647, %v1879
    %vm1890 = vcmp.eq.f32.partialorder %v1889, 8.507059e+37
    %v1891 = vand.u32 %v1879, 2147483648
    %v1892 = vor.u32 1.1754944e-38, %v1891
    %v1893 = vsel %vm1890, %v1892, %v1888
    %v1894 = vmul.f32 1.0, %v1893
    %v1895 = vsub.f32 1.0, %v1894
    %1897 = vrot.lane.b32.xlu0 %v1895, 8
    %v1898 = vpop.permute.xlu0 %1897
    %1900 = vrot.lane.b32.xlu0 %v1895, 16
    %v1901 = vpop.permute.xlu0 %1900
    %1903 = vrot.lane.b32.xlu0 %v1895, 24
    %v1904 = vpop.permute.xlu0 %1903
    %1906 = vrot.lane.b32.xlu0 %v1895, 32
    %v1907 = vpop.permute.xlu0 %1906
    %1909 = vrot.lane.b32.xlu0 %v1895, 40
    %v1910 = vpop.permute.xlu0 %1909
    %1912 = vrot.lane.b32.xlu0 %v1895, 48
    %v1913 = vpop.permute.xlu0 %1912
    %1915 = vrot.lane.b32.xlu0 %v1895, 56
    %v1916 = vpop.permute.xlu0 %1915
    %v1918 = vsel %vm320, %v1895, %v1898
    %v1919 = vsel %vm322, %v1918, %v1901
    %v1920 = vsel %vm324, %v1919, %v1904
    %v1921 = vsel %vm125, %v1920, %v1907
    %v1922 = vsel %vm327, %v1921, %v1910
    %v1923 = vsel %vm329, %v1922, %v1913
    %v1924 = vsel %vm331, %v1923, %v1916
    %1926 = vrot.lane.b32.xlu0 %v1924, 64
    %v1927 = vpop.permute.xlu0 %1926
    %v1929 = vsel %vm526, %v1735, %v1927
    %v1930 = vld [vmem:[#allocation10 + $0x18] sm:$0xff]
    %v1931 = vsub.f32 %v1930, 1.0
    %v1932 = vmul.f32 %v1931, 100.0
    %v1933 = vxor.u32 %v1932, 2147483648
    %v1934 = vmul.f32 %v1933, 1.442695
    %v1935 = vpow.pop %v1934
    %v1936 = vadd.f32 %v1935, 1.0
    %v1937 = vrcp.pop %v1936
    %v1938 = vmul.f32 %v1936, %v1937
    %v1939 = vsub.f32 1.0, %v1938
    %v1940 = vmul.f32 %v1937, %v1939
    %v1941 = vadd.f32 %v1937, %v1940
    %vm1942 = vweird.f32 %v1936
    %vm1943 = vweird.f32 %v1937
    %vm1944 = vmor %vm1942, %vm1943
    %v1945 = vsel %vm1944, %v1937, %v1941
    %v1946 = vand.u32 2147483647, %v1936
    %vm1947 = vcmp.eq.f32.partialorder %v1946, 8.507059e+37
    %v1948 = vand.u32 %v1936, 2147483648
    %v1949 = vor.u32 1.1754944e-38, %v1948
    %v1950 = vsel %vm1947, %v1949, %v1945
    %v1951 = vmul.f32 1.0, %v1950
    %v1952 = vsub.f32 1.0, %v1951
    %v1953 = vmul.f32 %v1929, %v1952
    %1954 = vst [vmem:[#allocation12 + $0x18] sm:$0xff] %v1953
    %1955 = vst.msk [vmem:[#allocation11] sm:$0xff] %vm125, %v1521
    %s1956 = scalar_lea.vmem [#allocation11], 8
    %1957 = vst.msk [vmem:[%s1956] sm:$0xff] %vm125, %v1546
    // Predicated region
    $region46: #{tpu_custom_call.1} parent=1 // pred_check
      _
    $region47: #{tpu_custom_call.1} parent=1 // pred_check_branch
      %1959 = sbr.rel (0) target = $region49
    $region48: #{tpu_custom_call.1} parent=1 // pred_region
      %1961 = vsyncadd [#allocation4], 0
      %s1962 = sshll.u32 [#allocation11], 4
      %s1963 = int_to_ptr.vmem [resolvable:$true] %s1962
      %s1964 = sshll.u32 %s6, 4
      %s1965 = int_to_ptr.hbm [resolvable:$true] %s1964
      %1970 = dma.vmem_to_hbm [thread:$0]  %s1963, 256, %s1965, [#allocation4], 128, 128, 8
    $region49: #{tpu_custom_call.1} parent=1 // pred_fallthru
      _
    // Predicated region
    $region50: #{tpu_custom_call.1} parent=1 // pred_check
      _
    $region51: #{tpu_custom_call.1} parent=1 // pred_check_branch
      %1972 = sbr.rel (0) target = $region53
    $region52: #{tpu_custom_call.1} parent=1 // pred_region
      %1974 = vsyncadd [#allocation13], 0
      %s1975 = sshll.u32 [#allocation12], 4
      %s1976 = int_to_ptr.vmem [resolvable:$true] %s1975
      %s1977 = sshll.u32 %s7, 4
      %s1978 = int_to_ptr.hbm [resolvable:$true] %s1977
      %1983 = dma.vmem_to_hbm [thread:$0]  %s1976, 512, %s1978, [#allocation13], 128, 128, 8
    $region53: #{tpu_custom_call.1} parent=1 // pred_fallthru
      _
    // Predicated region
    $region54: #{tpu_custom_call.1} parent=1 // pred_check
      _
    $region55: #{tpu_custom_call.1} parent=1 // pred_check_branch
      %1985 = sbr.rel (0) target = $region57
    $region56: #{tpu_custom_call.1} parent=1 // pred_region
      %1987 = dma.done [#allocation4], 256
    $region57: #{tpu_custom_call.1} parent=1 // pred_fallthru
      _
    // Predicated region
    $region58: #{tpu_custom_call.1} parent=1 // pred_check
      _
    $region59: #{tpu_custom_call.1} parent=1 // pred_check_branch
      %1989 = sbr.rel (0) target = $region61
    $region60: #{tpu_custom_call.1} parent=1 // pred_region
      %1991 = dma.done [#allocation13], 512
    $region61: #{tpu_custom_call.1} parent=1 // pred_fallthru
      _
    %1992 = vsyncpa [#allocation3], 1
    %1993 = vsyncpa [#allocation6], 1
    %1994 = vsyncpa [#allocation9], 1
    %1995 = vsyncpa [#allocation4], 1
    %1996 = vsyncpa [#allocation13], 1

</llo_original>
